<compile_context>
chip_gen: v5e
topology: v5e:2x2
jax: 0.10.0
libtpu: 0.0.40
codegen_flags: <defaults>
</compile_context>

<pallas_src>
import functools

import numpy as np
import jax
import jax.numpy as jnp
from jax.experimental import pallas as pl
from jax.experimental.pallas import tpu as pltpu


def _round_up(x, m):
    return (x + m - 1) // m * m


# ----------------------------------------------------------------------------
# Fused kernel: (kv conv) + (q conv) + adaptive pool + L2 norm + MH attention +
#               project_out, one image per grid step.
# ----------------------------------------------------------------------------

def _fused_attention_kernel(x_ref, y_ref, wkv_ref, bkv_ref, wq_ref, bq_ref,
                            pool_ref, temp_ref, hmask_ref, pw_ref, pb_ref,
                            o_ref, *, H, W, H2, W2, dim, mxu_dtype):
    md = mxu_dtype
    f32 = jnp.float32
    n, n2 = H * W, H2 * W2
    eps2 = 1e-24                                   # F.normalize eps=1e-12, squared

    # ---- kv = kv_dwconv(kv(x)) : single im2col matmul, K = 9*dim (MXU) ------
    xp = x_ref[0]                                  # (H+2, Wp, dim), zero pad ring
    xcol = jnp.concatenate(
        [xp[t // 3:t // 3 + H, t % 3:t % 3 + W, :].reshape(n, dim)
         for t in range(9)], axis=-1)              # (n, 9*dim)
    kv = jnp.dot(xcol.astype(md), wkv_ref[...],
                 preferred_element_type=f32) + bkv_ref[...]   # (n, 2*dim) pos-major
    k = kv[:, :dim]                                # (n, dim)
    v = kv[:, dim:]                                # (n, dim)

    # ---- q = q_dwconv(q(y)) : single im2col matmul, K = 9*dim ---------------
    yp = y_ref[0]                                  # (H2+2, Wp2, dim)
    ycol = jnp.concatenate(
        [yp[t // 3:t // 3 + H2, t % 3:t % 3 + W2, :].reshape(n2, dim)
         for t in range(9)], axis=-1)              # (n2, 9*dim)
    q = jnp.dot(ycol.astype(md), wq_ref[...],
                preferred_element_type=f32) + bq_ref[...]     # (n2, dim) pos-major

    # ---- adaptive average pool of k: constant pooling matrix on the MXU -----
    kp = jnp.dot(pool_ref[...], k.astype(md),
                 preferred_element_type=f32)       # (n2, dim)

    # ---- L2-normalize over the spatial axis, fold temperature ---------------
    q_cm = q.T                                     # (dim, n2)  tiny transpose
    qn = q_cm * jax.lax.rsqrt(
        jnp.maximum(jnp.sum(q_cm * q_cm, axis=-1, keepdims=True), eps2))
    kn = kp * jax.lax.rsqrt(
        jnp.maximum(jnp.sum(kp * kp, axis=0, keepdims=True), eps2))
    qs = qn * temp_ref[...]                        # per-head temperature (dim, 1)

    # ---- multi-head attention: all heads at once, block-diagonal mask -------
    logits = jnp.dot(qs.astype(md), kn.astype(md),
                     preferred_element_type=f32) + hmask_ref[...]   # (dim, dim)
    m = jnp.max(logits, axis=-1, keepdims=True)
    e = jnp.exp(logits - m)
    p = e * pl.reciprocal(jnp.sum(e, axis=-1, keepdims=True), approx=True)

    # out[c, pos] = sum_c' attn[c, c'] * v[pos, c']   (A @ B^T, no explicit .T)
    out = jax.lax.dot_general(p.astype(md), v.astype(md),
                              (((1,), (1,)), ((), ())),
                              preferred_element_type=f32)     # (dim, n) chan-major

    # ---- fused project_out (1x1) : direct NCHW (dim, H*W) lane-dense store --
    o_ref[0] = jnp.dot(pw_ref[...], out.astype(md),
                       preferred_element_type=f32) + pb_ref[...]


def _pallas_fused_attention(x_pad, y_pad, c, H, W, H2, W2, dim, mxu_dtype):
    B, Hx, Wxp, _ = x_pad.shape
    _, Hy, Wyp, _ = y_pad.shape
    n = H * W

    kernel = functools.partial(_fused_attention_kernel, H=H, W=W, H2=H2, W2=W2,
                               dim=dim, mxu_dtype=mxu_dtype)

    def whole(arr):
        nd = arr.ndim
        return pl.BlockSpec(arr.shape, lambda b, _nd=nd: (0,) * _nd)

    return pl.pallas_call(
        kernel,
        out_shape=jax.ShapeDtypeStruct((B, dim, n), jnp.float32),
        grid=(B,),
        in_specs=[
            pl.BlockSpec((1, Hx, Wxp, dim), lambda b: (b, 0, 0, 0)),
            pl.BlockSpec((1, Hy, Wyp, dim), lambda b: (b, 0, 0, 0)),
            whole(c["w_kv"]), whole(c["bias_kv"]),
            whole(c["w_q"]), whole(c["bias_q"]),
            whole(c["pool"]), whole(c["temp_col"]), whole(c["hmask"]),
            whole(c["proj_wt"]), whole(c["proj_b"]),
        ],
        out_specs=pl.BlockSpec((1, dim, n), lambda b: (b, 0, 0)),
        # grid=(B,) + "parallel": one image per TensorCore on v7x (2 TCs/chip).
        # On v5e/v6e (1 TC) this is a short serial loop; fold B into one step if
        # it ever becomes the bottleneck there.
        compiler_params=pltpu.CompilerParams(dimension_semantics=("parallel",)),
    )(x_pad, y_pad, c["w_kv"], c["bias_kv"], c["w_q"], c["bias_q"], c["pool"],
      c["temp_col"], c["hmask"], c["proj_wt"], c["proj_b"])


# ----------------------------------------------------------------------------
# Host-side constant prep (built once in make_attention_fn)
# ----------------------------------------------------------------------------

def _pad_nhwc_aligned(t_nchw):
    """NCHW -> NHWC, zero-pad spatially by 1, pad width to a multiple of 8.

    Extra zero columns past W+1 are never read by the 3x3 taps; they only keep
    in-kernel reshapes layout-aligned."""
    B, C, H, W = t_nchw.shape
    t = jnp.transpose(t_nchw, (0, 2, 3, 1))
    wp = _round_up(W + 2, 8)
    return jnp.pad(t, ((0, 0), (1, 1), (1, wp - W - 1), (0, 0)))


def _adaptive_pool_matrix(in_h, in_w, out_h, out_w):
    """(out_h*out_w, in_h*in_w) matrix implementing F.adaptive_avg_pool2d exactly
    (including non-divisible adaptive windows)."""
    P = np.zeros((out_h * out_w, in_h * in_w), np.float32)
    for oh in range(out_h):
        h0 = (oh * in_h) // out_h
        h1 = -((-(oh + 1) * in_h) // out_h)
        for ow in range(out_w):
            w0 = (ow * in_w) // out_w
            w1 = -((-(ow + 1) * in_w) // out_w)
            cnt = float((h1 - h0) * (w1 - w0))
            for ih in range(h0, h1):
                for iw in range(w0, w1):
                    P[oh * out_w + ow, ih * in_w + iw] = 1.0 / cnt
    return P


def _conv_bias_map(H, W, tap_bias, out_bias):
    """Exact bias of `3x3(zero_pad(1x1(x) + b1)) + b2` as a (H*W, C) map.

    tap_bias[t, c]: contribution of the 1x1 bias routed through 3x3 tap t into
    output channel c; counted only where the tap lands on an interior pixel
    (the 1x1 output is zero-padded before the 3x3)."""
    tap_bias = np.asarray(tap_bias, np.float32)
    out_bias = np.asarray(out_bias, np.float32)
    C = tap_bias.shape[1]
    hh = np.arange(H)[:, None]
    ww = np.arange(W)[None, :]
    bias = np.zeros((H, W, C), np.float32)
    for t in range(9):
        di, dj = t // 3, t % 3
        inside = ((hh + di >= 1) & (hh + di <= H) &
                  (ww + dj >= 1) & (ww + dj <= W)).astype(np.float32)
        bias += inside[:, :, None] * tap_bias[t][None, None, :]
    bias += out_bias[None, None, :]
    return bias.reshape(H * W, C)


# ----------------------------------------------------------------------------
# Parameters (deterministic; matches nn.Module shapes with bias=True).
# NOTE on loading real PyTorch weights:
#   Conv2d 1x1 (out,in,1,1)      -> transpose to (in, out)            (kv_w, q_w, proj_w)
#   depthwise 3x3 (C,1,3,3)      -> reshape/permute to (9 taps, C)    (kv_dw_w)
#   full 3x3 (out,in,3,3)        -> permute to (9 taps, in, out)      (q_dw_w)
# ----------------------------------------------------------------------------

def init_params(key, dim, num_heads):
    ks = jax.random.split(key, 10)
    return {
        "kv_w": jax.random.normal(ks[0], (dim, 2 * dim), jnp.float32) * 0.1,
        "kv_b": jax.random.normal(ks[1], (2 * dim,), jnp.float32) * 0.01,
        "kv_dw_w": jax.random.normal(ks[2], (9, 2 * dim), jnp.float32) * 0.1,
        "kv_dw_b": jax.random.normal(ks[3], (2 * dim,), jnp.float32) * 0.01,
        "q_w": jax.random.normal(ks[4], (dim, dim), jnp.float32) * 0.1,
        "q_b": jax.random.normal(ks[5], (dim,), jnp.float32) * 0.01,
        "q_dw_w": jax.random.normal(ks[6], (9, dim, dim), jnp.float32) * 0.1,
        "q_dw_b": jax.random.normal(ks[7], (dim,), jnp.float32) * 0.01,
        "proj_w": jax.random.normal(ks[8], (dim, dim), jnp.float32) * 0.1,
        "proj_b": jax.random.normal(ks[9], (dim,), jnp.float32) * 0.01,
        "temperature": jnp.ones((num_heads,), jnp.float32),
    }


# ----------------------------------------------------------------------------
# Forward-pass factory: builds baked constants once, returns a jitted forward.
# ----------------------------------------------------------------------------

def make_attention_fn(params, H, W, H2, W2, num_heads, mxu_dtype=jnp.bfloat16):
    dim = params["q_w"].shape[0]
    hd = dim // num_heads
    md = mxu_dtype

    # Fold the 1x1 convs into the following 3x3s -> single im2col weights (K=9*dim)
    kv_w = np.asarray(params["kv_w"])
    kv_dw_w = np.asarray(params["kv_dw_w"])
    q_w = np.asarray(params["q_w"])
    q_dw_w = np.asarray(params["q_dw_w"])
    w_kv = (kv_w[None, :, :] * kv_dw_w[:, None, :]).reshape(9 * dim, 2 * dim)
    w_q = np.einsum("ij,tjc->tic", q_w, q_dw_w).reshape(9 * dim, dim)

    # Exact per-position bias maps (zero-padded 3x3 boundary handling)
    bias_kv = _conv_bias_map(H, W, kv_dw_w * np.asarray(params["kv_b"])[None, :],
                             params["kv_dw_b"])
    bias_q = _conv_bias_map(H2, W2,
                            np.einsum("j,tjc->tc", np.asarray(params["q_b"]), q_dw_w),
                            params["q_dw_b"])

    pool = _adaptive_pool_matrix(H, W, H2, W2)                 # (H2*W2, H*W)
    temp_col = np.repeat(np.asarray(params["temperature"]), hd).reshape(dim, 1)
    head = np.arange(dim) // hd
    hmask = np.where(head[:, None] == head[None, :], 0.0, -1e30).astype(np.float32)
    proj_wt = np.asarray(params["proj_w"]).T                   # (out, in)
    proj_b = np.asarray(params["proj_b"]).reshape(dim, 1)

    consts = dict(
        w_kv=jnp.asarray(w_kv, md),
        bias_kv=jnp.asarray(bias_kv, jnp.float32),
        w_q=jnp.asarray(w_q, md),
        bias_q=jnp.asarray(bias_q, jnp.float32),
        pool=jnp.asarray(pool, md),
        temp_col=jnp.asarray(temp_col, jnp.float32),
        hmask=jnp.asarray(hmask, jnp.float32),
        proj_wt=jnp.asarray(proj_wt, md),
        proj_b=jnp.asarray(proj_b, jnp.float32),
    )

    # TODO(synk): for very large H/W/C, row-tile the per-image block (halo of 1)
    # and set vmem_limit_bytes explicitly to respect v7x's 64 MiB VMEM; the whole
    # per-image working set is <1 MiB at these sizes, so a single block is right.
    @jax.jit
    def forward(x, y):
        B, C, Hx, Wx = x.shape
        assert (Hx, Wx, C) == (H, W, dim)
        x_pad = _pad_nhwc_aligned(x)                           # (B, H+2, ~W+2, dim) f32
        y_pad = _pad_nhwc_aligned(y)
        out = _pallas_fused_attention(x_pad, y_pad, consts, H, W, H2, W2, dim, md)
        return out.reshape(B, dim, H, W)                       # NCHW, no transposes

    return forward


# ----------------------------------------------------------------------------

if __name__ == "__main__":
    key = jax.random.PRNGKey(0)
    kx, ky, kp = jax.random.split(key, 3)

    B, dim, num_heads = 2, 32, 4
    H = W = 16
    H2 = W2 = 8

    x = jax.random.normal(kx, (B, dim, H, W), jnp.float32)
    y = jax.random.normal(ky, (B, dim, H2, W2), jnp.float32)
    params = init_params(kp, dim, num_heads)

    # Default: bf16 MXU inputs (native on v5e/v6e/v7x), f32 accumulation/VPU math.
    attn_bf16 = make_attention_fn(params, H, W, H2, W2, num_heads,
                                  mxu_dtype=jnp.bfloat16)
    out = jax.block_until_ready(attn_bf16(x, y))

    # Exact-semantics f32 MXU path (slower: multi-pass f32 MXU emulation).
    attn_f32 = make_attention_fn(params, H, W, H2, W2, num_heads,
                                 mxu_dtype=jnp.float32)
    out_f32 = jax.block_until_ready(attn_f32(x, y))

    assert out.shape == (B, dim, H, W), out.shape
    assert out_f32.shape == (B, dim, H, W), out_f32.shape
    assert jnp.all(jnp.isfinite(out))
    assert jnp.all(jnp.isfinite(out_f32))
    print("KERNEL_OK")
</pallas_src>

<mosaic_0001>
module attributes {stable_mosaic.version = 11 : i64} {
  func.func @_fused_attention_kernel(%arg0: i32, %arg1: memref<1x18x24x32xf32, #tpu.memory_space<vmem>>, %arg2: memref<1x10x16x32xf32, #tpu.memory_space<vmem>>, %arg3: memref<288x64xbf16, #tpu.memory_space<vmem>>, %arg4: memref<256x64xf32, #tpu.memory_space<vmem>>, %arg5: memref<288x32xbf16, #tpu.memory_space<vmem>>, %arg6: memref<64x32xf32, #tpu.memory_space<vmem>>, %arg7: memref<64x256xbf16, #tpu.memory_space<vmem>>, %arg8: memref<32x1xf32, #tpu.memory_space<vmem>>, %arg9: memref<32x32xf32, #tpu.memory_space<vmem>>, %arg10: memref<32x32xbf16, #tpu.memory_space<vmem>>, %arg11: memref<32x1xf32, #tpu.memory_space<vmem>>, %arg12: memref<1x32x256xf32, #tpu.memory_space<vmem>>) attributes {dimension_semantics = [#tpu.dimension_semantics<parallel>], iteration_bounds = array<i64: 2>, scalar_prefetch = 0 : i64, scratch_operands = 0 : i64, tpu.core_type = #tpu.core_type<tc>, window_params = [{transform_indices = @transform_0, window_bounds = array<i64: 1, 18, 24, 32>}, {transform_indices = @transform_1, window_bounds = array<i64: 1, 10, 16, 32>}, {pipeline_mode = #tpu.pipeline_mode<synchronous>, transform_indices = @transform_2, window_bounds = array<i64: 288, 64>}, {pipeline_mode = #tpu.pipeline_mode<synchronous>, transform_indices = @transform_3, window_bounds = array<i64: 256, 64>}, {pipeline_mode = #tpu.pipeline_mode<synchronous>, transform_indices = @transform_4, window_bounds = array<i64: 288, 32>}, {pipeline_mode = #tpu.pipeline_mode<synchronous>, transform_indices = @transform_5, window_bounds = array<i64: 64, 32>}, {pipeline_mode = #tpu.pipeline_mode<synchronous>, transform_indices = @transform_6, window_bounds = array<i64: 64, 256>}, {pipeline_mode = #tpu.pipeline_mode<synchronous>, transform_indices = @transform_7, window_bounds = array<i64: 32, 1>}, {pipeline_mode = #tpu.pipeline_mode<synchronous>, transform_indices = @transform_8, window_bounds = array<i64: 32, 32>}, {pipeline_mode = #tpu.pipeline_mode<synchronous>, transform_indices = @transform_9, window_bounds = array<i64: 32, 32>}, {pipeline_mode = #tpu.pipeline_mode<synchronous>, transform_indices = @transform_10, window_bounds = array<i64: 32, 1>}, {transform_indices = @transform_11, window_bounds = array<i64: 1, 32, 256>}]} {
    %c0 = arith.constant 0 : index
    %c0_0 = arith.constant 0 : index
    %c0_1 = arith.constant 0 : index
    %c0_2 = arith.constant 0 : index
    %0 = vector.load %arg1[%c0, %c0_0, %c0_1, %c0_2] : memref<1x18x24x32xf32, #tpu.memory_space<vmem>>, vector<1x18x24x32xf32>
    %1 = vector.shape_cast %0 : vector<1x18x24x32xf32> to vector<18x24x32xf32>
    %2 = vector.extract_strided_slice %1 {offsets = [0, 0, 0], sizes = [16, 16, 32], strides = [1, 1, 1]} : vector<18x24x32xf32> to vector<16x16x32xf32>
    %3 = vector.shape_cast %2 : vector<16x16x32xf32> to vector<256x32xf32>
    %4 = vector.extract_strided_slice %1 {offsets = [0, 1, 0], sizes = [16, 16, 32], strides = [1, 1, 1]} : vector<18x24x32xf32> to vector<16x16x32xf32>
    %5 = vector.shape_cast %4 : vector<16x16x32xf32> to vector<256x32xf32>
    %6 = vector.extract_strided_slice %1 {offsets = [0, 2, 0], sizes = [16, 16, 32], strides = [1, 1, 1]} : vector<18x24x32xf32> to vector<16x16x32xf32>
    %7 = vector.shape_cast %6 : vector<16x16x32xf32> to vector<256x32xf32>
    %8 = vector.extract_strided_slice %1 {offsets = [1, 0, 0], sizes = [16, 16, 32], strides = [1, 1, 1]} : vector<18x24x32xf32> to vector<16x16x32xf32>
    %9 = vector.shape_cast %8 : vector<16x16x32xf32> to vector<256x32xf32>
    %10 = vector.extract_strided_slice %1 {offsets = [1, 1, 0], sizes = [16, 16, 32], strides = [1, 1, 1]} : vector<18x24x32xf32> to vector<16x16x32xf32>
    %11 = vector.shape_cast %10 : vector<16x16x32xf32> to vector<256x32xf32>
    %12 = vector.extract_strided_slice %1 {offsets = [1, 2, 0], sizes = [16, 16, 32], strides = [1, 1, 1]} : vector<18x24x32xf32> to vector<16x16x32xf32>
    %13 = vector.shape_cast %12 : vector<16x16x32xf32> to vector<256x32xf32>
    %14 = vector.extract_strided_slice %1 {offsets = [2, 0, 0], sizes = [16, 16, 32], strides = [1, 1, 1]} : vector<18x24x32xf32> to vector<16x16x32xf32>
    %15 = vector.shape_cast %14 : vector<16x16x32xf32> to vector<256x32xf32>
    %16 = vector.extract_strided_slice %1 {offsets = [2, 1, 0], sizes = [16, 16, 32], strides = [1, 1, 1]} : vector<18x24x32xf32> to vector<16x16x32xf32>
    %17 = vector.shape_cast %16 : vector<16x16x32xf32> to vector<256x32xf32>
    %18 = vector.extract_strided_slice %1 {offsets = [2, 2, 0], sizes = [16, 16, 32], strides = [1, 1, 1]} : vector<18x24x32xf32> to vector<16x16x32xf32>
    %19 = vector.shape_cast %18 : vector<16x16x32xf32> to vector<256x32xf32>
    %20 = tpu.concatenate %3, %5, %7, %9, %11, %13, %15, %17, %19 in 1 : vector<256x32xf32>, vector<256x32xf32>, vector<256x32xf32>, vector<256x32xf32>, vector<256x32xf32>, vector<256x32xf32>, vector<256x32xf32>, vector<256x32xf32>, vector<256x32xf32> -> vector<256x288xf32>
    %21 = arith.truncf %20 : vector<256x288xf32> to vector<256x288xbf16>
    %c0_3 = arith.constant 0 : index
    %c0_4 = arith.constant 0 : index
    %22 = vector.load %arg3[%c0_3, %c0_4] : memref<288x64xbf16, #tpu.memory_space<vmem>>, vector<288x64xbf16>
    %cst = arith.constant dense<0.000000e+00> : vector<256x64xf32>
    %23 = tpu.matmul %21, %22, %cst {dimension_numbers = #tpu.dot_dimension_numbers<[1], [0], [0], [1], [0, 0, 1, 1], [], []>} : vector<256x288xbf16>, vector<288x64xbf16>, vector<256x64xf32> -> vector<256x64xf32>
    %c0_5 = arith.constant 0 : index
    %c0_6 = arith.constant 0 : index
    %24 = vector.load %arg4[%c0_5, %c0_6] : memref<256x64xf32, #tpu.memory_space<vmem>>, vector<256x64xf32>
    %25 = arith.addf %23, %24 : vector<256x64xf32>
    %26 = vector.extract_strided_slice %25 {offsets = [0, 0], sizes = [256, 32], strides = [1, 1]} : vector<256x64xf32> to vector<256x32xf32>
    %27 = vector.extract_strided_slice %25 {offsets = [0, 32], sizes = [256, 32], strides = [1, 1]} : vector<256x64xf32> to vector<256x32xf32>
    %c0_7 = arith.constant 0 : index
    %c0_8 = arith.constant 0 : index
    %c0_9 = arith.constant 0 : index
    %c0_10 = arith.constant 0 : index
    %28 = vector.load %arg2[%c0_7, %c0_8, %c0_9, %c0_10] : memref<1x10x16x32xf32, #tpu.memory_space<vmem>>, vector<1x10x16x32xf32>
    %29 = vector.shape_cast %28 : vector<1x10x16x32xf32> to vector<10x16x32xf32>
    %30 = vector.extract_strided_slice %29 {offsets = [0, 0, 0], sizes = [8, 8, 32], strides = [1, 1, 1]} : vector<10x16x32xf32> to vector<8x8x32xf32>
    %31 = vector.shape_cast %30 : vector<8x8x32xf32> to vector<64x32xf32>
    %32 = vector.extract_strided_slice %29 {offsets = [0, 1, 0], sizes = [8, 8, 32], strides = [1, 1, 1]} : vector<10x16x32xf32> to vector<8x8x32xf32>
    %33 = vector.shape_cast %32 : vector<8x8x32xf32> to vector<64x32xf32>
    %34 = vector.extract_strided_slice %29 {offsets = [0, 2, 0], sizes = [8, 8, 32], strides = [1, 1, 1]} : vector<10x16x32xf32> to vector<8x8x32xf32>
    %35 = vector.shape_cast %34 : vector<8x8x32xf32> to vector<64x32xf32>
    %36 = vector.extract_strided_slice %29 {offsets = [1, 0, 0], sizes = [8, 8, 32], strides = [1, 1, 1]} : vector<10x16x32xf32> to vector<8x8x32xf32>
    %37 = vector.shape_cast %36 : vector<8x8x32xf32> to vector<64x32xf32>
    %38 = vector.extract_strided_slice %29 {offsets = [1, 1, 0], sizes = [8, 8, 32], strides = [1, 1, 1]} : vector<10x16x32xf32> to vector<8x8x32xf32>
    %39 = vector.shape_cast %38 : vector<8x8x32xf32> to vector<64x32xf32>
    %40 = vector.extract_strided_slice %29 {offsets = [1, 2, 0], sizes = [8, 8, 32], strides = [1, 1, 1]} : vector<10x16x32xf32> to vector<8x8x32xf32>
    %41 = vector.shape_cast %40 : vector<8x8x32xf32> to vector<64x32xf32>
    %42 = vector.extract_strided_slice %29 {offsets = [2, 0, 0], sizes = [8, 8, 32], strides = [1, 1, 1]} : vector<10x16x32xf32> to vector<8x8x32xf32>
    %43 = vector.shape_cast %42 : vector<8x8x32xf32> to vector<64x32xf32>
    %44 = vector.extract_strided_slice %29 {offsets = [2, 1, 0], sizes = [8, 8, 32], strides = [1, 1, 1]} : vector<10x16x32xf32> to vector<8x8x32xf32>
    %45 = vector.shape_cast %44 : vector<8x8x32xf32> to vector<64x32xf32>
    %46 = vector.extract_strided_slice %29 {offsets = [2, 2, 0], sizes = [8, 8, 32], strides = [1, 1, 1]} : vector<10x16x32xf32> to vector<8x8x32xf32>
    %47 = vector.shape_cast %46 : vector<8x8x32xf32> to vector<64x32xf32>
    %48 = tpu.concatenate %31, %33, %35, %37, %39, %41, %43, %45, %47 in 1 : vector<64x32xf32>, vector<64x32xf32>, vector<64x32xf32>, vector<64x32xf32>, vector<64x32xf32>, vector<64x32xf32>, vector<64x32xf32>, vector<64x32xf32>, vector<64x32xf32> -> vector<64x288xf32>
    %49 = arith.truncf %48 : vector<64x288xf32> to vector<64x288xbf16>
    %c0_11 = arith.constant 0 : index
    %c0_12 = arith.constant 0 : index
    %50 = vector.load %arg5[%c0_11, %c0_12] : memref<288x32xbf16, #tpu.memory_space<vmem>>, vector<288x32xbf16>
    %cst_13 = arith.constant dense<0.000000e+00> : vector<64x32xf32>
    %51 = tpu.matmul %49, %50, %cst_13 {dimension_numbers = #tpu.dot_dimension_numbers<[1], [0], [0], [1], [0, 0, 1, 1], [], []>} : vector<64x288xbf16>, vector<288x32xbf16>, vector<64x32xf32> -> vector<64x32xf32>
    %c0_14 = arith.constant 0 : index
    %c0_15 = arith.constant 0 : index
    %52 = vector.load %arg6[%c0_14, %c0_15] : memref<64x32xf32, #tpu.memory_space<vmem>>, vector<64x32xf32>
    %53 = arith.addf %51, %52 : vector<64x32xf32>
    %c0_16 = arith.constant 0 : index
    %c0_17 = arith.constant 0 : index
    %54 = vector.load %arg7[%c0_16, %c0_17] : memref<64x256xbf16, #tpu.memory_space<vmem>>, vector<64x256xbf16>
    %55 = arith.truncf %26 : vector<256x32xf32> to vector<256x32xbf16>
    %cst_18 = arith.constant dense<0.000000e+00> : vector<64x32xf32>
    %56 = tpu.matmul %54, %55, %cst_18 {dimension_numbers = #tpu.dot_dimension_numbers<[1], [0], [0], [1], [0, 0, 1, 1], [], []>} : vector<64x256xbf16>, vector<256x32xbf16>, vector<64x32xf32> -> vector<64x32xf32>
    %57 = tpu.transpose %53, [1, 0] : vector<64x32xf32> -> vector<32x64xf32>
    %58 = arith.mulf %57, %57 : vector<32x64xf32>
    %cst_19 = arith.constant dense<0.000000e+00> : vector<32xf32>
    %59 = vector.multi_reduction <add>, %58, %cst_19 [1] : vector<32x64xf32> to vector<32xf32>
    %60 = vector.shape_cast %59 : vector<32xf32> to vector<32x1xf32>
    %cst_20 = arith.constant 1.000000e-24 : f32
    %61 = vector.broadcast %cst_20 : f32 to vector<32x1xf32>
    %62 = arith.maximumf %60, %61 : vector<32x1xf32>
    %63 = math.rsqrt %62 : vector<32x1xf32>
    %64 = vector.broadcast %63 : vector<32x1xf32> to vector<32x64xf32>
    %65 = arith.mulf %57, %64 : vector<32x64xf32>
    %66 = arith.mulf %56, %56 : vector<64x32xf32>
    %cst_21 = arith.constant dense<0.000000e+00> : vector<32xf32>
    %67 = vector.multi_reduction <add>, %66, %cst_21 [0] : vector<64x32xf32> to vector<32xf32>
    %68 = vector.shape_cast %67 : vector<32xf32> to vector<1x32xf32>
    %cst_22 = arith.constant 1.000000e-24 : f32
    %69 = vector.broadcast %cst_22 : f32 to vector<1x32xf32>
    %70 = arith.maximumf %68, %69 : vector<1x32xf32>
    %71 = math.rsqrt %70 : vector<1x32xf32>
    %72 = vector.broadcast %71 : vector<1x32xf32> to vector<64x32xf32>
    %73 = arith.mulf %56, %72 : vector<64x32xf32>
    %c0_23 = arith.constant 0 : index
    %c0_24 = arith.constant 0 : index
    %74 = vector.load %arg8[%c0_23, %c0_24] : memref<32x1xf32, #tpu.memory_space<vmem>>, vector<32x1xf32>
    %75 = vector.broadcast %74 : vector<32x1xf32> to vector<32x64xf32>
    %76 = arith.mulf %65, %75 : vector<32x64xf32>
    %77 = arith.truncf %76 : vector<32x64xf32> to vector<32x64xbf16>
    %78 = arith.truncf %73 : vector<64x32xf32> to vector<64x32xbf16>
    %cst_25 = arith.constant dense<0.000000e+00> : vector<32x32xf32>
    %79 = tpu.matmul %77, %78, %cst_25 {dimension_numbers = #tpu.dot_dimension_numbers<[1], [0], [0], [1], [0, 0, 1, 1], [], []>} : vector<32x64xbf16>, vector<64x32xbf16>, vector<32x32xf32> -> vector<32x32xf32>
    %c0_26 = arith.constant 0 : index
    %c0_27 = arith.constant 0 : index
    %80 = vector.load %arg9[%c0_26, %c0_27] : memref<32x32xf32, #tpu.memory_space<vmem>>, vector<32x32xf32>
    %81 = arith.addf %79, %80 : vector<32x32xf32>
    %cst_28 = arith.constant dense<0xFF800000> : vector<32xf32>
    %82 = vector.multi_reduction <maximumf>, %81, %cst_28 [1] : vector<32x32xf32> to vector<32xf32>
    %83 = vector.shape_cast %82 : vector<32xf32> to vector<32x1xf32>
    %84 = vector.broadcast %83 : vector<32x1xf32> to vector<32x32xf32>
    %85 = arith.subf %81, %84 : vector<32x32xf32>
    %86 = math.exp %85 : vector<32x32xf32>
    %cst_29 = arith.constant dense<0.000000e+00> : vector<32xf32>
    %87 = vector.multi_reduction <add>, %86, %cst_29 [1] : vector<32x32xf32> to vector<32xf32>
    %88 = vector.shape_cast %87 : vector<32xf32> to vector<32x1xf32>
    %89 = tpu.reciprocal %88 {approx = true} : vector<32x1xf32> -> vector<32x1xf32>
    %90 = vector.broadcast %89 : vector<32x1xf32> to vector<32x32xf32>
    %91 = arith.mulf %86, %90 : vector<32x32xf32>
    %92 = arith.truncf %91 : vector<32x32xf32> to vector<32x32xbf16>
    %93 = arith.truncf %27 : vector<256x32xf32> to vector<256x32xbf16>
    %cst_30 = arith.constant dense<0.000000e+00> : vector<32x256xf32>
    %94 = tpu.matmul %92, %93, %cst_30 {dimension_numbers = #tpu.dot_dimension_numbers<[1], [1], [0], [0], [0, 0, 1, 0], [], []>} : vector<32x32xbf16>, vector<256x32xbf16>, vector<32x256xf32> -> vector<32x256xf32>
    %c0_31 = arith.constant 0 : index
    %c0_32 = arith.constant 0 : index
    %95 = vector.load %arg10[%c0_31, %c0_32] : memref<32x32xbf16, #tpu.memory_space<vmem>>, vector<32x32xbf16>
    %96 = arith.truncf %94 : vector<32x256xf32> to vector<32x256xbf16>
    %cst_33 = arith.constant dense<0.000000e+00> : vector<32x256xf32>
    %97 = tpu.matmul %95, %96, %cst_33 {dimension_numbers = #tpu.dot_dimension_numbers<[1], [0], [0], [1], [0, 0, 1, 1], [], []>} : vector<32x32xbf16>, vector<32x256xbf16>, vector<32x256xf32> -> vector<32x256xf32>
    %c0_34 = arith.constant 0 : index
    %c0_35 = arith.constant 0 : index
    %98 = vector.load %arg11[%c0_34, %c0_35] : memref<32x1xf32, #tpu.memory_space<vmem>>, vector<32x1xf32>
    %99 = vector.broadcast %98 : vector<32x1xf32> to vector<32x256xf32>
    %100 = arith.addf %97, %99 : vector<32x256xf32>
    %c0_36 = arith.constant 0 : index
    %c0_37 = arith.constant 0 : index
    %c0_38 = arith.constant 0 : index
    %101 = vector.load %arg12[%c0_36, %c0_37, %c0_38] : memref<1x32x256xf32, #tpu.memory_space<vmem>>, vector<1x32x256xf32>
    %102 = vector.shape_cast %101 : vector<1x32x256xf32> to vector<32x256xf32>
    %103 = vector.shape_cast %100 : vector<32x256xf32> to vector<1x32x256xf32>
    tpu.vector_store %arg12[%c0_36, %c0_37, %c0_38], %103 {strides = array<i32>} : memref<1x32x256xf32, #tpu.memory_space<vmem>>, vector<1x32x256xf32>,
    return
  }
  func.func @transform_0(%arg0: i32) -> (i32, i32, i32, i32) {
    %c0_i32 = arith.constant 0 : i32
    %c0_i32_0 = arith.constant 0 : i32
    %c0_i32_1 = arith.constant 0 : i32
    %c0_i32_2 = arith.constant 0 : i32
    return %arg0, %c0_i32, %c0_i32_0, %c0_i32_1 : i32, i32, i32, i32
  }
  func.func @transform_1(%arg0: i32) -> (i32, i32, i32, i32) {
    %c0_i32 = arith.constant 0 : i32
    %c0_i32_0 = arith.constant 0 : i32
    %c0_i32_1 = arith.constant 0 : i32
    %c0_i32_2 = arith.constant 0 : i32
    return %arg0, %c0_i32, %c0_i32_0, %c0_i32_1 : i32, i32, i32, i32
  }
  func.func @transform_2(%arg0: i32) -> (i32, i32) {
    %c0_i32 = arith.constant 0 : i32
    %c0_i32_0 = arith.constant 0 : i32
    %c0_i32_1 = arith.constant 0 : i32
    return %c0_i32, %c0_i32_0 : i32, i32
  }
  func.func @transform_3(%arg0: i32) -> (i32, i32) {
    %c0_i32 = arith.constant 0 : i32
    %c0_i32_0 = arith.constant 0 : i32
    %c0_i32_1 = arith.constant 0 : i32
    return %c0_i32, %c0_i32_0 : i32, i32
  }
  func.func @transform_4(%arg0: i32) -> (i32, i32) {
    %c0_i32 = arith.constant 0 : i32
    %c0_i32_0 = arith.constant 0 : i32
    %c0_i32_1 = arith.constant 0 : i32
    return %c0_i32, %c0_i32_0 : i32, i32
  }
  func.func @transform_5(%arg0: i32) -> (i32, i32) {
    %c0_i32 = arith.constant 0 : i32
    %c0_i32_0 = arith.constant 0 : i32
    %c0_i32_1 = arith.constant 0 : i32
    return %c0_i32, %c0_i32_0 : i32, i32
  }
  func.func @transform_6(%arg0: i32) -> (i32, i32) {
    %c0_i32 = arith.constant 0 : i32
    %c0_i32_0 = arith.constant 0 : i32
    %c0_i32_1 = arith.constant 0 : i32
    return %c0_i32, %c0_i32_0 : i32, i32
  }
  func.func @transform_7(%arg0: i32) -> (i32, i32) {
    %c0_i32 = arith.constant 0 : i32
    %c0_i32_0 = arith.constant 0 : i32
    %c0_i32_1 = arith.constant 0 : i32
    return %c0_i32, %c0_i32_0 : i32, i32
  }
  func.func @transform_8(%arg0: i32) -> (i32, i32) {
    %c0_i32 = arith.constant 0 : i32
    %c0_i32_0 = arith.constant 0 : i32
    %c0_i32_1 = arith.constant 0 : i32
    return %c0_i32, %c0_i32_0 : i32, i32
  }
  func.func @transform_9(%arg0: i32) -> (i32, i32) {
    %c0_i32 = arith.constant 0 : i32
    %c0_i32_0 = arith.constant 0 : i32
    %c0_i32_1 = arith.constant 0 : i32
    return %c0_i32, %c0_i32_0 : i32, i32
  }
  func.func @transform_10(%arg0: i32) -> (i32, i32) {
    %c0_i32 = arith.constant 0 : i32
    %c0_i32_0 = arith.constant 0 : i32
    %c0_i32_1 = arith.constant 0 : i32
    return %c0_i32, %c0_i32_0 : i32, i32
  }
  func.func @transform_11(%arg0: i32) -> (i32, i32, i32) {
    %c0_i32 = arith.constant 0 : i32
    %c0_i32_0 = arith.constant 0 : i32
    %c0_i32_1 = arith.constant 0 : i32
    return %arg0, %c0_i32, %c0_i32_0 : i32, i32, i32
  }
}

</mosaic_0001>

<llo_original>
// kernel: forward.1
$region0: #{forward.1}
  #allocation0 [shape = 'u32[]', space=smem, size = 0x4, offset = 0x4, fixed_abs, tag = 'smem constant byte address 0x4 - core index']
  #allocation1 [shape = 'u32[72,128]{1,0:T(1,128)}', space=vmem, size = 0x9000, scoped, tag = 'internal scratch']
  %s0 = inlined_call_operand.vmem [shape: f32[2,18,24,32], index: 0, kind: input, shape index: {}]
  %s1 = inlined_call_operand.vmem [shape: f32[2,10,16,32], index: 1, kind: input, shape index: {}]
  %s2 = inlined_call_operand.vmem [shape: bf16[288,64], index: 2, kind: input, shape index: {}]
  %s3 = inlined_call_operand.vmem [shape: f32[256,64], index: 3, kind: input, shape index: {}]
  %s4 = inlined_call_operand.vmem [shape: bf16[288,32], index: 4, kind: input, shape index: {}]
  %s5 = inlined_call_operand.vmem [shape: f32[64,32], index: 5, kind: input, shape index: {}]
  %s6 = inlined_call_operand.vmem [shape: bf16[64,256], index: 6, kind: input, shape index: {}]
  %s7 = inlined_call_operand.vmem [shape: f32[32,1], index: 7, kind: input, shape index: {}]
  %s8 = inlined_call_operand.vmem [shape: f32[32,32], index: 8, kind: input, shape index: {}]
  %s9 = inlined_call_operand.vmem [shape: bf16[32,32], index: 9, kind: input, shape index: {}]
  %s10 = inlined_call_operand.vmem [shape: f32[32,1], index: 10, kind: input, shape index: {}]
  %s11 = inlined_call_operand.vmem [shape: f32[2,32,256], index: 11, kind: output, shape index: {}]
  %s12 = sld [smem:[#allocation0]]
  $region77: #{forward.1} parent=0
    _
  %s14 = ssub.s32 1, %s12
  %s15 = scalar_select 0, %s14, %s12
  loop: start=0, step=1, limit=4
  $region2: #{forward.1} parent=0 // loop_pre_header
    _
  $region3: #{forward.1} parent=0 // loop_header
    %s17 = sphi 0, %s21
    %p18 = scmp.ge.s32.totalorder %s17, 4
    %s27 = sphi 0, %s29
    %s30 = sphi 0, %s27
    %s31 = sphi 0, %s30
    %s47 = sphi 0, %s31
    %s53 = sphi 0, %s55
    %s56 = sphi 0, %s53
    %s57 = sphi 0, %s56
    %s73 = sphi 0, %s57
    %s77 = sphi 0, %s77
    %s79 = sphi 0, %s77
    %s80 = sphi 0, %s79
    %s94 = sphi 0, %s80
    %s98 = sphi 0, %s98
    %s100 = sphi 0, %s98
    %s101 = sphi 0, %s100
    %s115 = sphi 0, %s101
    %s119 = sphi 0, %s119
    %s121 = sphi 0, %s119
    %s122 = sphi 0, %s121
    %s136 = sphi 0, %s122
    %s140 = sphi 0, %s140
    %s142 = sphi 0, %s140
    %s143 = sphi 0, %s142
    %s157 = sphi 0, %s143
    %s161 = sphi 0, %s161
    %s163 = sphi 0, %s161
    %s164 = sphi 0, %s163
    %s178 = sphi 0, %s164
    %s182 = sphi 0, %s182
    %s184 = sphi 0, %s182
    %s185 = sphi 0, %s184
    %s199 = sphi 0, %s185
    %s203 = sphi 0, %s203
    %s205 = sphi 0, %s203
    %s206 = sphi 0, %s205
    %s220 = sphi 0, %s206
    %s224 = sphi 0, %s224
    %s226 = sphi 0, %s224
    %s227 = sphi 0, %s226
    %s241 = sphi 0, %s227
    %s245 = sphi 0, %s245
    %s247 = sphi 0, %s245
    %s248 = sphi 0, %s247
    %s262 = sphi 0, %s248
    %s268 = sphi 0, %s270
    %s271 = sphi 0, %s268
    %s272 = sphi 0, %s271
    %s288 = sphi 0, %s272
  $region4: #{forward.1} parent=0 // loop_header_branch
    %20 = sbr.rel (%p18) target = $region8
  $region5: #{forward.1} parent=0 // loop_body
    %s22 = ssub.s32 %s17, 1
    %s23 = ssub.s32 %s17, 2
    %s24 = sadd.s32 %s17, 1
    %s25 = ssub.s32 %s17, %s24
    %p26 = scmp.eq.s32.totalorder %s25, 0
    %s28 = sadd.s32 %s27, 1
    %s29 = scalar_select %p26, %s27, %s28
    %p32 = pneg %p26
    %p33 = scmp.eq.s32.totalorder %s17, 1
    %p34 = por %p32, %p33
    %p35 = scmp.ne.s32.totalorder %s27, %s30
    %p36 = scmp.eq.s32.totalorder %s17, 0
    %p37 = por %p35, %p36
    %p38 = scmp.ne.s32.totalorder %s27, %s30
    %p39 = scmp.eq.s32.totalorder %s22, 1
    %p40 = por %p38, %p39
    %p41 = scmp.ne.s32.totalorder %s30, %s31
    %p42 = scmp.eq.s32.totalorder %s22, 0
    %p43 = por %p41, %p42
    %p44 = scmp.ne.s32.totalorder %s30, %s31
    %p45 = scmp.eq.s32.totalorder %s23, 1
    %p46 = por %p44, %p45
    %p48 = scmp.ne.s32.totalorder %s31, %s47
    %p49 = scmp.eq.s32.totalorder %s23, 0
    %p50 = por %p48, %p49
    %s51 = ssub.s32 %s17, %s24
    %p52 = scmp.eq.s32.totalorder %s51, 0
    %s54 = sadd.s32 %s53, 1
    %s55 = scalar_select %p52, %s53, %s54
    %p58 = pneg %p52
    %p59 = scmp.eq.s32.totalorder %s17, 1
    %p60 = por %p58, %p59
    %p61 = scmp.ne.s32.totalorder %s53, %s56
    %p62 = scmp.eq.s32.totalorder %s17, 0
    %p63 = por %p61, %p62
    %p64 = scmp.ne.s32.totalorder %s53, %s56
    %p65 = scmp.eq.s32.totalorder %s22, 1
    %p66 = por %p64, %p65
    %p67 = scmp.ne.s32.totalorder %s56, %s57
    %p68 = scmp.eq.s32.totalorder %s22, 0
    %p69 = por %p67, %p68
    %p70 = scmp.ne.s32.totalorder %s56, %s57
    %p71 = scmp.eq.s32.totalorder %s23, 1
    %p72 = por %p70, %p71
    %p74 = scmp.ne.s32.totalorder %s57, %s73
    %p75 = scmp.eq.s32.totalorder %s23, 0
    %p76 = por %p74, %p75
    %s78 = sadd.s32 %s77, 1
    %p81 = scmp.eq.s32.totalorder %s17, 1
    %p82 = scmp.ne.s32.totalorder %s77, %s79
    %p83 = scmp.eq.s32.totalorder %s17, 0
    %p84 = por %p82, %p83
    %p85 = scmp.ne.s32.totalorder %s77, %s79
    %p86 = scmp.eq.s32.totalorder %s22, 1
    %p87 = por %p85, %p86
    %p88 = scmp.ne.s32.totalorder %s79, %s80
    %p89 = scmp.eq.s32.totalorder %s22, 0
    %p90 = por %p88, %p89
    %p91 = scmp.ne.s32.totalorder %s79, %s80
    %p92 = scmp.eq.s32.totalorder %s23, 1
    %p93 = por %p91, %p92
    %p95 = scmp.ne.s32.totalorder %s80, %s94
    %p96 = scmp.eq.s32.totalorder %s23, 0
    %p97 = por %p95, %p96
    %s99 = sadd.s32 %s98, 1
    %p102 = scmp.eq.s32.totalorder %s17, 1
    %p103 = scmp.ne.s32.totalorder %s98, %s100
    %p104 = scmp.eq.s32.totalorder %s17, 0
    %p105 = por %p103, %p104
    %p106 = scmp.ne.s32.totalorder %s98, %s100
    %p107 = scmp.eq.s32.totalorder %s22, 1
    %p108 = por %p106, %p107
    %p109 = scmp.ne.s32.totalorder %s100, %s101
    %p110 = scmp.eq.s32.totalorder %s22, 0
    %p111 = por %p109, %p110
    %p112 = scmp.ne.s32.totalorder %s100, %s101
    %p113 = scmp.eq.s32.totalorder %s23, 1
    %p114 = por %p112, %p113
    %p116 = scmp.ne.s32.totalorder %s101, %s115
    %p117 = scmp.eq.s32.totalorder %s23, 0
    %p118 = por %p116, %p117
    %s120 = sadd.s32 %s119, 1
    %p123 = scmp.eq.s32.totalorder %s17, 1
    %p124 = scmp.ne.s32.totalorder %s119, %s121
    %p125 = scmp.eq.s32.totalorder %s17, 0
    %p126 = por %p124, %p125
    %p127 = scmp.ne.s32.totalorder %s119, %s121
    %p128 = scmp.eq.s32.totalorder %s22, 1
    %p129 = por %p127, %p128
    %p130 = scmp.ne.s32.totalorder %s121, %s122
    %p131 = scmp.eq.s32.totalorder %s22, 0
    %p132 = por %p130, %p131
    %p133 = scmp.ne.s32.totalorder %s121, %s122
    %p134 = scmp.eq.s32.totalorder %s23, 1
    %p135 = por %p133, %p134
    %p137 = scmp.ne.s32.totalorder %s122, %s136
    %p138 = scmp.eq.s32.totalorder %s23, 0
    %p139 = por %p137, %p138
    %s141 = sadd.s32 %s140, 1
    %p144 = scmp.eq.s32.totalorder %s17, 1
    %p145 = scmp.ne.s32.totalorder %s140, %s142
    %p146 = scmp.eq.s32.totalorder %s17, 0
    %p147 = por %p145, %p146
    %p148 = scmp.ne.s32.totalorder %s140, %s142
    %p149 = scmp.eq.s32.totalorder %s22, 1
    %p150 = por %p148, %p149
    %p151 = scmp.ne.s32.totalorder %s142, %s143
    %p152 = scmp.eq.s32.totalorder %s22, 0
    %p153 = por %p151, %p152
    %p154 = scmp.ne.s32.totalorder %s142, %s143
    %p155 = scmp.eq.s32.totalorder %s23, 1
    %p156 = por %p154, %p155
    %p158 = scmp.ne.s32.totalorder %s143, %s157
    %p159 = scmp.eq.s32.totalorder %s23, 0
    %p160 = por %p158, %p159
    %s162 = sadd.s32 %s161, 1
    %p165 = scmp.eq.s32.totalorder %s17, 1
    %p166 = scmp.ne.s32.totalorder %s161, %s163
    %p167 = scmp.eq.s32.totalorder %s17, 0
    %p168 = por %p166, %p167
    %p169 = scmp.ne.s32.totalorder %s161, %s163
    %p170 = scmp.eq.s32.totalorder %s22, 1
    %p171 = por %p169, %p170
    %p172 = scmp.ne.s32.totalorder %s163, %s164
    %p173 = scmp.eq.s32.totalorder %s22, 0
    %p174 = por %p172, %p173
    %p175 = scmp.ne.s32.totalorder %s163, %s164
    %p176 = scmp.eq.s32.totalorder %s23, 1
    %p177 = por %p175, %p176
    %p179 = scmp.ne.s32.totalorder %s164, %s178
    %p180 = scmp.eq.s32.totalorder %s23, 0
    %p181 = por %p179, %p180
    %s183 = sadd.s32 %s182, 1
    %p186 = scmp.eq.s32.totalorder %s17, 1
    %p187 = scmp.ne.s32.totalorder %s182, %s184
    %p188 = scmp.eq.s32.totalorder %s17, 0
    %p189 = por %p187, %p188
    %p190 = scmp.ne.s32.totalorder %s182, %s184
    %p191 = scmp.eq.s32.totalorder %s22, 1
    %p192 = por %p190, %p191
    %p193 = scmp.ne.s32.totalorder %s184, %s185
    %p194 = scmp.eq.s32.totalorder %s22, 0
    %p195 = por %p193, %p194
    %p196 = scmp.ne.s32.totalorder %s184, %s185
    %p197 = scmp.eq.s32.totalorder %s23, 1
    %p198 = por %p196, %p197
    %p200 = scmp.ne.s32.totalorder %s185, %s199
    %p201 = scmp.eq.s32.totalorder %s23, 0
    %p202 = por %p200, %p201
    %s204 = sadd.s32 %s203, 1
    %p207 = scmp.eq.s32.totalorder %s17, 1
    %p208 = scmp.ne.s32.totalorder %s203, %s205
    %p209 = scmp.eq.s32.totalorder %s17, 0
    %p210 = por %p208, %p209
    %p211 = scmp.ne.s32.totalorder %s203, %s205
    %p212 = scmp.eq.s32.totalorder %s22, 1
    %p213 = por %p211, %p212
    %p214 = scmp.ne.s32.totalorder %s205, %s206
    %p215 = scmp.eq.s32.totalorder %s22, 0
    %p216 = por %p214, %p215
    %p217 = scmp.ne.s32.totalorder %s205, %s206
    %p218 = scmp.eq.s32.totalorder %s23, 1
    %p219 = por %p217, %p218
    %p221 = scmp.ne.s32.totalorder %s206, %s220
    %p222 = scmp.eq.s32.totalorder %s23, 0
    %p223 = por %p221, %p222
    %s225 = sadd.s32 %s224, 1
    %p228 = scmp.eq.s32.totalorder %s17, 1
    %p229 = scmp.ne.s32.totalorder %s224, %s226
    %p230 = scmp.eq.s32.totalorder %s17, 0
    %p231 = por %p229, %p230
    %p232 = scmp.ne.s32.totalorder %s224, %s226
    %p233 = scmp.eq.s32.totalorder %s22, 1
    %p234 = por %p232, %p233
    %p235 = scmp.ne.s32.totalorder %s226, %s227
    %p236 = scmp.eq.s32.totalorder %s22, 0
    %p237 = por %p235, %p236
    %p238 = scmp.ne.s32.totalorder %s226, %s227
    %p239 = scmp.eq.s32.totalorder %s23, 1
    %p240 = por %p238, %p239
    %p242 = scmp.ne.s32.totalorder %s227, %s241
    %p243 = scmp.eq.s32.totalorder %s23, 0
    %p244 = por %p242, %p243
    %s246 = sadd.s32 %s245, 1
    %p249 = scmp.eq.s32.totalorder %s17, 1
    %p250 = scmp.ne.s32.totalorder %s245, %s247
    %p251 = scmp.eq.s32.totalorder %s17, 0
    %p252 = por %p250, %p251
    %p253 = scmp.ne.s32.totalorder %s245, %s247
    %p254 = scmp.eq.s32.totalorder %s22, 1
    %p255 = por %p253, %p254
    %p256 = scmp.ne.s32.totalorder %s247, %s248
    %p257 = scmp.eq.s32.totalorder %s22, 0
    %p258 = por %p256, %p257
    %p259 = scmp.ne.s32.totalorder %s247, %s248
    %p260 = scmp.eq.s32.totalorder %s23, 1
    %p261 = por %p259, %p260
    %p263 = scmp.ne.s32.totalorder %s248, %s262
    %p264 = scmp.eq.s32.totalorder %s23, 0
    %p265 = por %p263, %p264
    %s266 = ssub.s32 %s17, %s24
    %p267 = scmp.eq.s32.totalorder %s266, 0
    %s269 = sadd.s32 %s268, 1
    %s270 = scalar_select %p267, %s268, %s269
    %p273 = pneg %p267
    %p274 = scmp.eq.s32.totalorder %s17, 1
    %p275 = por %p273, %p274
    %p276 = scmp.ne.s32.totalorder %s268, %s271
    %p277 = scmp.eq.s32.totalorder %s17, 0
    %p278 = por %p276, %p277
    %p279 = scmp.ne.s32.totalorder %s268, %s271
    %p280 = scmp.eq.s32.totalorder %s22, 1
    %p281 = por %p279, %p280
    %p282 = scmp.ne.s32.totalorder %s271, %s272
    %p283 = scmp.eq.s32.totalorder %s22, 0
    %p284 = por %p282, %p283
    %p285 = scmp.ne.s32.totalorder %s271, %s272
    %p286 = scmp.eq.s32.totalorder %s23, 1
    %p287 = por %p285, %p286
    %p289 = scmp.ne.s32.totalorder %s272, %s288
    %p290 = scmp.eq.s32.totalorder %s23, 0
    %p291 = por %p289, %p290
    %p292 = scmp.le.s32.totalorder 1, %s17
    %p293 = scmp.lt.s32.totalorder %s17, 3
    %p294 = pnand %p292, %p293
    %p295 = pneg %p294
    // Predicated region
    $region9: #{forward.1} parent=5 // pred_check
      _
    $region10: #{forward.1} parent=5 // pred_check_branch
      %297 = sbr.rel (%p294) target = $region12
    $region11: #{forward.1} parent=5 // pred_region
      %s298 = ssub.s32 %s17, 1
      // Predicated region
      $region13: #{forward.1} parent=11 // pred_check
        %p299 = pneg %p90
      $region14: #{forward.1} parent=11 // pred_check_branch
        %301 = sbr.rel (%p299) target = $region16
      $region15: #{forward.1} parent=11 // pred_region
        _
      $region16: #{forward.1} parent=11 // pred_fallthru
        _
      // Predicated region
      $region17: #{forward.1} parent=11 // pred_check
        %p302 = pneg %p111
      $region18: #{forward.1} parent=11 // pred_check_branch
        %304 = sbr.rel (%p302) target = $region20
      $region19: #{forward.1} parent=11 // pred_region
        _
      $region20: #{forward.1} parent=11 // pred_fallthru
        _
      // Predicated region
      $region21: #{forward.1} parent=11 // pred_check
        %p305 = pneg %p132
      $region22: #{forward.1} parent=11 // pred_check_branch
        %307 = sbr.rel (%p305) target = $region24
      $region23: #{forward.1} parent=11 // pred_region
        _
      $region24: #{forward.1} parent=11 // pred_fallthru
        _
      // Predicated region
      $region25: #{forward.1} parent=11 // pred_check
        %p308 = pneg %p153
      $region26: #{forward.1} parent=11 // pred_check_branch
        %310 = sbr.rel (%p308) target = $region28
      $region27: #{forward.1} parent=11 // pred_region
        _
      $region28: #{forward.1} parent=11 // pred_fallthru
        _
      // Predicated region
      $region29: #{forward.1} parent=11 // pred_check
        %p311 = pneg %p174
      $region30: #{forward.1} parent=11 // pred_check_branch
        %313 = sbr.rel (%p311) target = $region32
      $region31: #{forward.1} parent=11 // pred_region
        _
      $region32: #{forward.1} parent=11 // pred_fallthru
        _
      // Predicated region
      $region33: #{forward.1} parent=11 // pred_check
        %p314 = pneg %p195
      $region34: #{forward.1} parent=11 // pred_check_branch
        %316 = sbr.rel (%p314) target = $region36
      $region35: #{forward.1} parent=11 // pred_region
        _
      $region36: #{forward.1} parent=11 // pred_fallthru
        _
      // Predicated region
      $region37: #{forward.1} parent=11 // pred_check
        %p317 = pneg %p216
      $region38: #{forward.1} parent=11 // pred_check_branch
        %319 = sbr.rel (%p317) target = $region40
      $region39: #{forward.1} parent=11 // pred_region
        _
      $region40: #{forward.1} parent=11 // pred_fallthru
        _
      // Predicated region
      $region41: #{forward.1} parent=11 // pred_check
        %p320 = pneg %p237
      $region42: #{forward.1} parent=11 // pred_check_branch
        %322 = sbr.rel (%p320) target = $region44
      $region43: #{forward.1} parent=11 // pred_region
        _
      $region44: #{forward.1} parent=11 // pred_fallthru
        _
      // Predicated region
      $region45: #{forward.1} parent=11 // pred_check
        %p323 = pneg %p258
      $region46: #{forward.1} parent=11 // pred_check_branch
        %325 = sbr.rel (%p323) target = $region48
      $region47: #{forward.1} parent=11 // pred_region
        _
      $region48: #{forward.1} parent=11 // pred_fallthru
        _
    $region12: #{forward.1} parent=5 // pred_fallthru
      _
    %p326 = scmp.lt.s32.totalorder %s17, 2
    // Predicated region
    $region49: #{forward.1} parent=5 // pred_check
      %p327 = pneg %p326
    $region50: #{forward.1} parent=5 // pred_check_branch
      %329 = sbr.rel (%p327) target = $region52
    $region51: #{forward.1} parent=5 // pred_region
      // Predicated region
      $region53: #{forward.1} parent=51 // pred_check
        %p330 = pneg %p37
      $region54: #{forward.1} parent=51 // pred_check_branch
        %332 = sbr.rel (%p330) target = $region56
      $region55: #{forward.1} parent=51 // pred_region
        %p333 = scmp.lt.s32.totalorder %s17, 1
        %s334 = scalar_select %p333, %s17, 1
        %s335 = smul.addr %s334, 54
        %s336 = smul.addr %s335, 8
        %s337 = scalar_lea.vmem %s0, %s336
      $region56: #{forward.1} parent=51 // pred_fallthru
        _
      // Predicated region
      $region57: #{forward.1} parent=51 // pred_check
        %p338 = pneg %p63
      $region58: #{forward.1} parent=51 // pred_check_branch
        %340 = sbr.rel (%p338) target = $region60
      $region59: #{forward.1} parent=51 // pred_region
        %p341 = scmp.lt.s32.totalorder %s17, 1
        %s342 = scalar_select %p341, %s17, 1
        %s343 = smul.addr %s342, 20
        %s344 = smul.addr %s343, 8
        %s345 = scalar_lea.vmem %s1, %s344
      $region60: #{forward.1} parent=51 // pred_fallthru
        _
    $region52: #{forward.1} parent=5 // pred_fallthru
      _
    %p346 = scmp.le.s32.totalorder 1, %s17
    %p347 = scmp.lt.s32.totalorder %s17, 3
    %p348 = pnand %p346, %p347
    %p349 = pneg %p348
    // Predicated region
    $region61: #{forward.1} parent=5 // pred_check
      _
    $region62: #{forward.1} parent=5 // pred_check_branch
      %351 = sbr.rel (%p348) target = $region64
    $region63: #{forward.1} parent=5 // pred_region
      %s352 = ssub.s32 %s17, 1
      %p353 = scmp.lt.s32.totalorder %s22, 1
      %s354 = scalar_select %p353, %s22, 1
      %s355 = smul.addr %s354, 54
      %s356 = smul.addr %s355, 8
      %s357 = scalar_lea.vmem %s0, %s356
      %p358 = pneg %p43
      %p359 = pneg %p40
      %p360 = scmp.lt.s32.totalorder %s22, 1
      %s361 = scalar_select %p360, %s22, 1
      %s362 = smul.addr %s361, 20
      %s363 = smul.addr %s362, 8
      %s364 = scalar_lea.vmem %s1, %s363
      %p365 = pneg %p69
      %p366 = pneg %p66
      %p367 = pneg %p90
      %p368 = pneg %p87
      %p369 = pneg %p111
      %p370 = pneg %p108
      %p371 = pneg %p132
      %p372 = pneg %p129
      %p373 = pneg %p153
      %p374 = pneg %p150
      %p375 = pneg %p174
      %p376 = pneg %p171
      %p377 = pneg %p195
      %p378 = pneg %p192
      %p379 = pneg %p216
      %p380 = pneg %p213
      %p381 = pneg %p237
      %p382 = pneg %p234
      %p383 = pneg %p258
      %p384 = pneg %p255
      %p385 = pneg %p284
      %p386 = pneg %p281
      %p387 = scmp.lt.s32.totalorder %s22, 1
      %s388 = scalar_select %p387, %s22, 1
      %s389 = smul.addr %s388, 8
      %s390 = smul.addr %s389, 8
      %s391 = scalar_lea.vmem %s11, %s390
      %p392 = scmp.lt.s32.totalorder %s22, 1
      %s393 = scalar_select %p392, %s22, 1
      %s394 = smul.addr %s393, 54
      %s395 = smul.addr %s394, 8
      %s396 = scalar_lea.vmem %s0, %s395
      %p397 = scmp.lt.s32.totalorder %s22, 1
      %s398 = scalar_select %p397, %s22, 1
      %s399 = smul.addr %s398, 20
      %s400 = smul.addr %s399, 8
      %s401 = scalar_lea.vmem %s1, %s400
      %p402 = scmp.lt.s32.totalorder %s22, 1
      %s403 = scalar_select %p402, %s22, 1
      %s404 = smul.addr %s403, 8
      %s405 = smul.addr %s404, 8
      %s406 = scalar_lea.vmem %s11, %s405
      %v408 = vld [vmem:[%s396] sm:$0xff]
      %v409 = vld [vmem:[%s396 + $0x8] sm:$0xff]
      %v410 = vld [vmem:[%s396 + $0x10] sm:$0xff]
      %v411 = vld [vmem:[%s396 + $0x18] sm:$0xff]
      %v412 = vld [vmem:[%s396 + $0x20] sm:$0xff]
      %v413 = vld [vmem:[%s396 + $0x28] sm:$0xff]
      %v414 = vld [vmem:[%s396 + $0x30] sm:$0xff]
      %v415 = vld [vmem:[%s396 + $0x38] sm:$0xff]
      %v416 = vld [vmem:[%s396 + $0x40] sm:$0xff]
      %v417 = vld [vmem:[%s396 + $0x48] sm:$0xff]
      %v418 = vld [vmem:[%s396 + $0x50] sm:$0xff]
      %v419 = vld [vmem:[%s396 + $0x58] sm:$0xff]
      %v420 = vld [vmem:[%s396 + $0x60] sm:$0xff]
      %v421 = vld [vmem:[%s396 + $0x68] sm:$0xff]
      %v422 = vld [vmem:[%s396 + $0x70] sm:$0xff]
      %v423 = vld [vmem:[%s396 + $0x78] sm:$0xff]
      %v424 = vld [vmem:[%s396 + $0x80] sm:$0xff]
      %v425 = vld [vmem:[%s396 + $0x88] sm:$0xff]
      %v426 = vld [vmem:[%s396 + $0x90] sm:$0xff]
      %v427 = vld [vmem:[%s396 + $0x98] sm:$0xff]
      %v428 = vld [vmem:[%s396 + $0xa0] sm:$0xff]
      %v429 = vld [vmem:[%s396 + $0xa8] sm:$0xff]
      %v430 = vld [vmem:[%s396 + $0xb0] sm:$0xff]
      %v431 = vld [vmem:[%s396 + $0xb8] sm:$0xff]
      %v432 = vld [vmem:[%s396 + $0xc0] sm:$0xff]
      %v433 = vld [vmem:[%s396 + $0xc8] sm:$0xff]
      %v434 = vld [vmem:[%s396 + $0xd0] sm:$0xff]
      %v435 = vld [vmem:[%s396 + $0xd8] sm:$0xff]
      %v436 = vld [vmem:[%s396 + $0xe0] sm:$0xff]
      %v437 = vld [vmem:[%s396 + $0xe8] sm:$0xff]
      %v438 = vld [vmem:[%s396 + $0xf0] sm:$0xff]
      %v439 = vld [vmem:[%s396 + $0xf8] sm:$0xff]
      %v440 = vld [vmem:[%s396 + $0x100] sm:$0xff]
      %v441 = vld [vmem:[%s396 + $0x108] sm:$0xff]
      %v442 = vld [vmem:[%s396 + $0x110] sm:$0xff]
      %v443 = vld [vmem:[%s396 + $0x118] sm:$0xff]
      %v444 = vld [vmem:[%s396 + $0x120] sm:$0xff]
      %v445 = vld [vmem:[%s396 + $0x128] sm:$0xff]
      %v446 = vld [vmem:[%s396 + $0x130] sm:$0xff]
      %v447 = vld [vmem:[%s396 + $0x138] sm:$0xff]
      %v448 = vld [vmem:[%s396 + $0x140] sm:$0xff]
      %v449 = vld [vmem:[%s396 + $0x148] sm:$0xff]
      %v450 = vld [vmem:[%s396 + $0x150] sm:$0xff]
      %v451 = vld [vmem:[%s396 + $0x158] sm:$0xff]
      %v452 = vld [vmem:[%s396 + $0x160] sm:$0xff]
      %v453 = vld [vmem:[%s396 + $0x168] sm:$0xff]
      %v454 = vld [vmem:[%s396 + $0x170] sm:$0xff]
      %v455 = vld [vmem:[%s396 + $0x178] sm:$0xff]
      %v456 = vld [vmem:[%s396 + $0x180] sm:$0xff]
      %v457 = vld [vmem:[%s396 + $0x188] sm:$0xff]
      %v458 = vld [vmem:[%s396 + $0x190] sm:$0xff]
      %v459 = vld [vmem:[%s396 + $0x198] sm:$0xff]
      %v460 = vld [vmem:[%s396 + $0x1a0] sm:$0xff]
      %v461 = vld [vmem:[%s396 + $0x1a8] sm:$0xff]
      %vm510 = vcmask 1046528
      %v511 = vrot.slane %v408, 1
      %v512 = vrot.slane %v409, 1
      %v513 = vsel %vm510, %v511, %v512
      %v514 = vrot.slane %v410, 1
      %v515 = vsel %vm510, %v512, %v514
      %v516 = vrot.slane %v411, 1
      %v517 = vrot.slane %v412, 1
      %v518 = vsel %vm510, %v516, %v517
      %v519 = vrot.slane %v413, 1
      %v520 = vsel %vm510, %v517, %v519
      %v521 = vrot.slane %v414, 1
      %v522 = vrot.slane %v415, 1
      %v523 = vsel %vm510, %v521, %v522
      %v524 = vrot.slane %v416, 1
      %v525 = vsel %vm510, %v522, %v524
      %v526 = vrot.slane %v417, 1
      %v527 = vrot.slane %v418, 1
      %v528 = vsel %vm510, %v526, %v527
      %v529 = vrot.slane %v419, 1
      %v530 = vsel %vm510, %v527, %v529
      %v531 = vrot.slane %v420, 1
      %v532 = vrot.slane %v421, 1
      %v533 = vsel %vm510, %v531, %v532
      %v534 = vrot.slane %v422, 1
      %v535 = vsel %vm510, %v532, %v534
      %v536 = vrot.slane %v423, 1
      %v537 = vrot.slane %v424, 1
      %v538 = vsel %vm510, %v536, %v537
      %v539 = vrot.slane %v425, 1
      %v540 = vsel %vm510, %v537, %v539
      %v541 = vrot.slane %v426, 1
      %v542 = vrot.slane %v427, 1
      %v543 = vsel %vm510, %v541, %v542
      %v544 = vrot.slane %v428, 1
      %v545 = vsel %vm510, %v542, %v544
      %v546 = vrot.slane %v429, 1
      %v547 = vrot.slane %v430, 1
      %v548 = vsel %vm510, %v546, %v547
      %v549 = vrot.slane %v431, 1
      %v550 = vsel %vm510, %v547, %v549
      %v551 = vrot.slane %v432, 1
      %v552 = vrot.slane %v433, 1
      %v553 = vsel %vm510, %v551, %v552
      %v554 = vrot.slane %v434, 1
      %v555 = vsel %vm510, %v552, %v554
      %v556 = vrot.slane %v435, 1
      %v557 = vrot.slane %v436, 1
      %v558 = vsel %vm510, %v556, %v557
      %v559 = vrot.slane %v437, 1
      %v560 = vsel %vm510, %v557, %v559
      %v561 = vrot.slane %v438, 1
      %v562 = vrot.slane %v439, 1
      %v563 = vsel %vm510, %v561, %v562
      %v564 = vrot.slane %v440, 1
      %v565 = vsel %vm510, %v562, %v564
      %v566 = vrot.slane %v441, 1
      %v567 = vrot.slane %v442, 1
      %v568 = vsel %vm510, %v566, %v567
      %v569 = vrot.slane %v443, 1
      %v570 = vsel %vm510, %v567, %v569
      %v571 = vrot.slane %v444, 1
      %v572 = vrot.slane %v445, 1
      %v573 = vsel %vm510, %v571, %v572
      %v574 = vrot.slane %v446, 1
      %v575 = vsel %vm510, %v572, %v574
      %v576 = vrot.slane %v447, 1
      %v577 = vrot.slane %v448, 1
      %v578 = vsel %vm510, %v576, %v577
      %v579 = vrot.slane %v449, 1
      %v580 = vsel %vm510, %v577, %v579
      %v581 = vrot.slane %v450, 1
      %v582 = vrot.slane %v451, 1
      %v583 = vsel %vm510, %v581, %v582
      %v584 = vrot.slane %v452, 1
      %v585 = vsel %vm510, %v582, %v584
      %v586 = vrot.slane %v453, 1
      %v587 = vrot.slane %v454, 1
      %v588 = vsel %vm510, %v586, %v587
      %v589 = vrot.slane %v455, 1
      %v590 = vsel %vm510, %v587, %v589
      %vm591 = vcmask 1045504
      %v592 = vrot.slane %v408, 2
      %v593 = vrot.slane %v409, 2
      %v594 = vsel %vm591, %v592, %v593
      %v595 = vrot.slane %v410, 2
      %v596 = vsel %vm591, %v593, %v595
      %v597 = vrot.slane %v411, 2
      %v598 = vrot.slane %v412, 2
      %v599 = vsel %vm591, %v597, %v598
      %v600 = vrot.slane %v413, 2
      %v601 = vsel %vm591, %v598, %v600
      %v602 = vrot.slane %v414, 2
      %v603 = vrot.slane %v415, 2
      %v604 = vsel %vm591, %v602, %v603
      %v605 = vrot.slane %v416, 2
      %v606 = vsel %vm591, %v603, %v605
      %v607 = vrot.slane %v417, 2
      %v608 = vrot.slane %v418, 2
      %v609 = vsel %vm591, %v607, %v608
      %v610 = vrot.slane %v419, 2
      %v611 = vsel %vm591, %v608, %v610
      %v612 = vrot.slane %v420, 2
      %v613 = vrot.slane %v421, 2
      %v614 = vsel %vm591, %v612, %v613
      %v615 = vrot.slane %v422, 2
      %v616 = vsel %vm591, %v613, %v615
      %v617 = vrot.slane %v423, 2
      %v618 = vrot.slane %v424, 2
      %v619 = vsel %vm591, %v617, %v618
      %v620 = vrot.slane %v425, 2
      %v621 = vsel %vm591, %v618, %v620
      %v622 = vrot.slane %v426, 2
      %v623 = vrot.slane %v427, 2
      %v624 = vsel %vm591, %v622, %v623
      %v625 = vrot.slane %v428, 2
      %v626 = vsel %vm591, %v623, %v625
      %v627 = vrot.slane %v429, 2
      %v628 = vrot.slane %v430, 2
      %v629 = vsel %vm591, %v627, %v628
      %v630 = vrot.slane %v431, 2
      %v631 = vsel %vm591, %v628, %v630
      %v632 = vrot.slane %v432, 2
      %v633 = vrot.slane %v433, 2
      %v634 = vsel %vm591, %v632, %v633
      %v635 = vrot.slane %v434, 2
      %v636 = vsel %vm591, %v633, %v635
      %v637 = vrot.slane %v435, 2
      %v638 = vrot.slane %v436, 2
      %v639 = vsel %vm591, %v637, %v638
      %v640 = vrot.slane %v437, 2
      %v641 = vsel %vm591, %v638, %v640
      %v642 = vrot.slane %v438, 2
      %v643 = vrot.slane %v439, 2
      %v644 = vsel %vm591, %v642, %v643
      %v645 = vrot.slane %v440, 2
      %v646 = vsel %vm591, %v643, %v645
      %v647 = vrot.slane %v441, 2
      %v648 = vrot.slane %v442, 2
      %v649 = vsel %vm591, %v647, %v648
      %v650 = vrot.slane %v443, 2
      %v651 = vsel %vm591, %v648, %v650
      %v652 = vrot.slane %v444, 2
      %v653 = vrot.slane %v445, 2
      %v654 = vsel %vm591, %v652, %v653
      %v655 = vrot.slane %v446, 2
      %v656 = vsel %vm591, %v653, %v655
      %v657 = vrot.slane %v447, 2
      %v658 = vrot.slane %v448, 2
      %v659 = vsel %vm591, %v657, %v658
      %v660 = vrot.slane %v449, 2
      %v661 = vsel %vm591, %v658, %v660
      %v662 = vrot.slane %v450, 2
      %v663 = vrot.slane %v451, 2
      %v664 = vsel %vm591, %v662, %v663
      %v665 = vrot.slane %v452, 2
      %v666 = vsel %vm591, %v663, %v665
      %v667 = vrot.slane %v453, 2
      %v668 = vrot.slane %v454, 2
      %v669 = vsel %vm591, %v667, %v668
      %v670 = vrot.slane %v455, 2
      %v671 = vsel %vm591, %v668, %v670
      %v675 = vrot.slane %v456, 1
      %v676 = vrot.slane %v457, 1
      %v677 = vsel %vm510, %v675, %v676
      %v678 = vrot.slane %v458, 1
      %v679 = vsel %vm510, %v676, %v678
      %v712 = vrot.slane %v456, 2
      %v713 = vrot.slane %v457, 2
      %v714 = vsel %vm591, %v712, %v713
      %v715 = vrot.slane %v458, 2
      %v716 = vsel %vm591, %v713, %v715
      %v720 = vrot.slane %v459, 1
      %v721 = vrot.slane %v460, 1
      %v722 = vsel %vm510, %v720, %v721
      %v723 = vrot.slane %v461, 1
      %v724 = vsel %vm510, %v721, %v723
      %v725 = vrot.slane %v459, 2
      %v726 = vrot.slane %v460, 2
      %v727 = vsel %vm591, %v725, %v726
      %v728 = vrot.slane %v461, 2
      %v729 = vsel %vm591, %v726, %v728
      %762 = vrot.lane.b32.xlu0 %v513, 32
      %v763 = vpop.permute.xlu0 %762
      %764 = vrot.lane.b32.xlu0 %v515, 32
      %v765 = vpop.permute.xlu0 %764
      %766 = vrot.lane.b32.xlu0 %v518, 32
      %v767 = vpop.permute.xlu0 %766
      %768 = vrot.lane.b32.xlu0 %v520, 32
      %v769 = vpop.permute.xlu0 %768
      %770 = vrot.lane.b32.xlu0 %v523, 32
      %v771 = vpop.permute.xlu0 %770
      %772 = vrot.lane.b32.xlu0 %v525, 32
      %v773 = vpop.permute.xlu0 %772
      %774 = vrot.lane.b32.xlu0 %v528, 32
      %v775 = vpop.permute.xlu0 %774
      %776 = vrot.lane.b32.xlu0 %v530, 32
      %v777 = vpop.permute.xlu0 %776
      %778 = vrot.lane.b32.xlu0 %v533, 32
      %v779 = vpop.permute.xlu0 %778
      %780 = vrot.lane.b32.xlu0 %v535, 32
      %v781 = vpop.permute.xlu0 %780
      %782 = vrot.lane.b32.xlu0 %v538, 32
      %v783 = vpop.permute.xlu0 %782
      %784 = vrot.lane.b32.xlu0 %v540, 32
      %v785 = vpop.permute.xlu0 %784
      %786 = vrot.lane.b32.xlu0 %v543, 32
      %v787 = vpop.permute.xlu0 %786
      %788 = vrot.lane.b32.xlu0 %v545, 32
      %v789 = vpop.permute.xlu0 %788
      %790 = vrot.lane.b32.xlu0 %v548, 32
      %v791 = vpop.permute.xlu0 %790
      %792 = vrot.lane.b32.xlu0 %v550, 32
      %v793 = vpop.permute.xlu0 %792
      %794 = vrot.lane.b32.xlu0 %v553, 32
      %v795 = vpop.permute.xlu0 %794
      %796 = vrot.lane.b32.xlu0 %v555, 32
      %v797 = vpop.permute.xlu0 %796
      %798 = vrot.lane.b32.xlu0 %v558, 32
      %v799 = vpop.permute.xlu0 %798
      %800 = vrot.lane.b32.xlu0 %v560, 32
      %v801 = vpop.permute.xlu0 %800
      %802 = vrot.lane.b32.xlu0 %v563, 32
      %v803 = vpop.permute.xlu0 %802
      %804 = vrot.lane.b32.xlu0 %v565, 32
      %v805 = vpop.permute.xlu0 %804
      %806 = vrot.lane.b32.xlu0 %v568, 32
      %v807 = vpop.permute.xlu0 %806
      %808 = vrot.lane.b32.xlu0 %v570, 32
      %v809 = vpop.permute.xlu0 %808
      %810 = vrot.lane.b32.xlu0 %v573, 32
      %v811 = vpop.permute.xlu0 %810
      %812 = vrot.lane.b32.xlu0 %v575, 32
      %v813 = vpop.permute.xlu0 %812
      %814 = vrot.lane.b32.xlu0 %v578, 32
      %v815 = vpop.permute.xlu0 %814
      %816 = vrot.lane.b32.xlu0 %v580, 32
      %v817 = vpop.permute.xlu0 %816
      %818 = vrot.lane.b32.xlu0 %v583, 32
      %v819 = vpop.permute.xlu0 %818
      %820 = vrot.lane.b32.xlu0 %v585, 32
      %v821 = vpop.permute.xlu0 %820
      %822 = vrot.lane.b32.xlu0 %v588, 32
      %v823 = vpop.permute.xlu0 %822
      %824 = vrot.lane.b32.xlu0 %v590, 32
      %v825 = vpop.permute.xlu0 %824
      %858 = vrot.lane.b32.xlu0 %v594, 64
      %v859 = vpop.permute.xlu0 %858
      %860 = vrot.lane.b32.xlu0 %v596, 64
      %v861 = vpop.permute.xlu0 %860
      %862 = vrot.lane.b32.xlu0 %v599, 64
      %v863 = vpop.permute.xlu0 %862
      %864 = vrot.lane.b32.xlu0 %v601, 64
      %v865 = vpop.permute.xlu0 %864
      %866 = vrot.lane.b32.xlu0 %v604, 64
      %v867 = vpop.permute.xlu0 %866
      %868 = vrot.lane.b32.xlu0 %v606, 64
      %v869 = vpop.permute.xlu0 %868
      %870 = vrot.lane.b32.xlu0 %v609, 64
      %v871 = vpop.permute.xlu0 %870
      %872 = vrot.lane.b32.xlu0 %v611, 64
      %v873 = vpop.permute.xlu0 %872
      %874 = vrot.lane.b32.xlu0 %v614, 64
      %v875 = vpop.permute.xlu0 %874
      %876 = vrot.lane.b32.xlu0 %v616, 64
      %v877 = vpop.permute.xlu0 %876
      %878 = vrot.lane.b32.xlu0 %v619, 64
      %v879 = vpop.permute.xlu0 %878
      %880 = vrot.lane.b32.xlu0 %v621, 64
      %v881 = vpop.permute.xlu0 %880
      %882 = vrot.lane.b32.xlu0 %v624, 64
      %v883 = vpop.permute.xlu0 %882
      %884 = vrot.lane.b32.xlu0 %v626, 64
      %v885 = vpop.permute.xlu0 %884
      %886 = vrot.lane.b32.xlu0 %v629, 64
      %v887 = vpop.permute.xlu0 %886
      %888 = vrot.lane.b32.xlu0 %v631, 64
      %v889 = vpop.permute.xlu0 %888
      %890 = vrot.lane.b32.xlu0 %v634, 64
      %v891 = vpop.permute.xlu0 %890
      %892 = vrot.lane.b32.xlu0 %v636, 64
      %v893 = vpop.permute.xlu0 %892
      %894 = vrot.lane.b32.xlu0 %v639, 64
      %v895 = vpop.permute.xlu0 %894
      %896 = vrot.lane.b32.xlu0 %v641, 64
      %v897 = vpop.permute.xlu0 %896
      %898 = vrot.lane.b32.xlu0 %v644, 64
      %v899 = vpop.permute.xlu0 %898
      %900 = vrot.lane.b32.xlu0 %v646, 64
      %v901 = vpop.permute.xlu0 %900
      %902 = vrot.lane.b32.xlu0 %v649, 64
      %v903 = vpop.permute.xlu0 %902
      %904 = vrot.lane.b32.xlu0 %v651, 64
      %v905 = vpop.permute.xlu0 %904
      %906 = vrot.lane.b32.xlu0 %v654, 64
      %v907 = vpop.permute.xlu0 %906
      %908 = vrot.lane.b32.xlu0 %v656, 64
      %v909 = vpop.permute.xlu0 %908
      %910 = vrot.lane.b32.xlu0 %v659, 64
      %v911 = vpop.permute.xlu0 %910
      %912 = vrot.lane.b32.xlu0 %v661, 64
      %v913 = vpop.permute.xlu0 %912
      %914 = vrot.lane.b32.xlu0 %v664, 64
      %v915 = vpop.permute.xlu0 %914
      %916 = vrot.lane.b32.xlu0 %v666, 64
      %v917 = vpop.permute.xlu0 %916
      %918 = vrot.lane.b32.xlu0 %v669, 64
      %v919 = vpop.permute.xlu0 %918
      %920 = vrot.lane.b32.xlu0 %v671, 64
      %v921 = vpop.permute.xlu0 %920
      %954 = vrot.lane.b32.xlu0 %v411, 96
      %v955 = vpop.permute.xlu0 %954
      %956 = vrot.lane.b32.xlu0 %v412, 96
      %v957 = vpop.permute.xlu0 %956
      %958 = vrot.lane.b32.xlu0 %v414, 96
      %v959 = vpop.permute.xlu0 %958
      %960 = vrot.lane.b32.xlu0 %v415, 96
      %v961 = vpop.permute.xlu0 %960
      %962 = vrot.lane.b32.xlu0 %v417, 96
      %v963 = vpop.permute.xlu0 %962
      %964 = vrot.lane.b32.xlu0 %v418, 96
      %v965 = vpop.permute.xlu0 %964
      %966 = vrot.lane.b32.xlu0 %v420, 96
      %v967 = vpop.permute.xlu0 %966
      %968 = vrot.lane.b32.xlu0 %v421, 96
      %v969 = vpop.permute.xlu0 %968
      %970 = vrot.lane.b32.xlu0 %v423, 96
      %v971 = vpop.permute.xlu0 %970
      %972 = vrot.lane.b32.xlu0 %v424, 96
      %v973 = vpop.permute.xlu0 %972
      %974 = vrot.lane.b32.xlu0 %v426, 96
      %v975 = vpop.permute.xlu0 %974
      %976 = vrot.lane.b32.xlu0 %v427, 96
      %v977 = vpop.permute.xlu0 %976
      %978 = vrot.lane.b32.xlu0 %v429, 96
      %v979 = vpop.permute.xlu0 %978
      %980 = vrot.lane.b32.xlu0 %v430, 96
      %v981 = vpop.permute.xlu0 %980
      %982 = vrot.lane.b32.xlu0 %v432, 96
      %v983 = vpop.permute.xlu0 %982
      %984 = vrot.lane.b32.xlu0 %v433, 96
      %v985 = vpop.permute.xlu0 %984
      %986 = vrot.lane.b32.xlu0 %v435, 96
      %v987 = vpop.permute.xlu0 %986
      %988 = vrot.lane.b32.xlu0 %v436, 96
      %v989 = vpop.permute.xlu0 %988
      %990 = vrot.lane.b32.xlu0 %v438, 96
      %v991 = vpop.permute.xlu0 %990
      %992 = vrot.lane.b32.xlu0 %v439, 96
      %v993 = vpop.permute.xlu0 %992
      %994 = vrot.lane.b32.xlu0 %v441, 96
      %v995 = vpop.permute.xlu0 %994
      %996 = vrot.lane.b32.xlu0 %v442, 96
      %v997 = vpop.permute.xlu0 %996
      %998 = vrot.lane.b32.xlu0 %v444, 96
      %v999 = vpop.permute.xlu0 %998
      %1000 = vrot.lane.b32.xlu0 %v445, 96
      %v1001 = vpop.permute.xlu0 %1000
      %1002 = vrot.lane.b32.xlu0 %v447, 96
      %v1003 = vpop.permute.xlu0 %1002
      %1004 = vrot.lane.b32.xlu0 %v448, 96
      %v1005 = vpop.permute.xlu0 %1004
      %1006 = vrot.lane.b32.xlu0 %v450, 96
      %v1007 = vpop.permute.xlu0 %1006
      %1008 = vrot.lane.b32.xlu0 %v451, 96
      %v1009 = vpop.permute.xlu0 %1008
      %1010 = vrot.lane.b32.xlu0 %v453, 96
      %v1011 = vpop.permute.xlu0 %1010
      %1012 = vrot.lane.b32.xlu0 %v454, 96
      %v1013 = vpop.permute.xlu0 %1012
      %1014 = vrot.lane.b32.xlu0 %v456, 96
      %v1015 = vpop.permute.xlu0 %1014
      %1016 = vrot.lane.b32.xlu0 %v457, 96
      %v1017 = vpop.permute.xlu0 %1016
      %1050 = vrot.lane.b32.xlu0 %v599, 32
      %v1051 = vpop.permute.xlu0 %1050
      %1052 = vrot.lane.b32.xlu0 %v601, 32
      %v1053 = vpop.permute.xlu0 %1052
      %1054 = vrot.lane.b32.xlu0 %v604, 32
      %v1055 = vpop.permute.xlu0 %1054
      %1056 = vrot.lane.b32.xlu0 %v606, 32
      %v1057 = vpop.permute.xlu0 %1056
      %1058 = vrot.lane.b32.xlu0 %v609, 32
      %v1059 = vpop.permute.xlu0 %1058
      %1060 = vrot.lane.b32.xlu0 %v611, 32
      %v1061 = vpop.permute.xlu0 %1060
      %1062 = vrot.lane.b32.xlu0 %v614, 32
      %v1063 = vpop.permute.xlu0 %1062
      %1064 = vrot.lane.b32.xlu0 %v616, 32
      %v1065 = vpop.permute.xlu0 %1064
      %1066 = vrot.lane.b32.xlu0 %v619, 32
      %v1067 = vpop.permute.xlu0 %1066
      %1068 = vrot.lane.b32.xlu0 %v621, 32
      %v1069 = vpop.permute.xlu0 %1068
      %1070 = vrot.lane.b32.xlu0 %v624, 32
      %v1071 = vpop.permute.xlu0 %1070
      %1072 = vrot.lane.b32.xlu0 %v626, 32
      %v1073 = vpop.permute.xlu0 %1072
      %1074 = vrot.lane.b32.xlu0 %v629, 32
      %v1075 = vpop.permute.xlu0 %1074
      %1076 = vrot.lane.b32.xlu0 %v631, 32
      %v1077 = vpop.permute.xlu0 %1076
      %1078 = vrot.lane.b32.xlu0 %v634, 32
      %v1079 = vpop.permute.xlu0 %1078
      %1080 = vrot.lane.b32.xlu0 %v636, 32
      %v1081 = vpop.permute.xlu0 %1080
      %1082 = vrot.lane.b32.xlu0 %v639, 32
      %v1083 = vpop.permute.xlu0 %1082
      %1084 = vrot.lane.b32.xlu0 %v641, 32
      %v1085 = vpop.permute.xlu0 %1084
      %1086 = vrot.lane.b32.xlu0 %v644, 32
      %v1087 = vpop.permute.xlu0 %1086
      %1088 = vrot.lane.b32.xlu0 %v646, 32
      %v1089 = vpop.permute.xlu0 %1088
      %1090 = vrot.lane.b32.xlu0 %v649, 32
      %v1091 = vpop.permute.xlu0 %1090
      %1092 = vrot.lane.b32.xlu0 %v651, 32
      %v1093 = vpop.permute.xlu0 %1092
      %1094 = vrot.lane.b32.xlu0 %v654, 32
      %v1095 = vpop.permute.xlu0 %1094
      %1096 = vrot.lane.b32.xlu0 %v656, 32
      %v1097 = vpop.permute.xlu0 %1096
      %1098 = vrot.lane.b32.xlu0 %v659, 32
      %v1099 = vpop.permute.xlu0 %1098
      %1100 = vrot.lane.b32.xlu0 %v661, 32
      %v1101 = vpop.permute.xlu0 %1100
      %1102 = vrot.lane.b32.xlu0 %v664, 32
      %v1103 = vpop.permute.xlu0 %1102
      %1104 = vrot.lane.b32.xlu0 %v666, 32
      %v1105 = vpop.permute.xlu0 %1104
      %1106 = vrot.lane.b32.xlu0 %v669, 32
      %v1107 = vpop.permute.xlu0 %1106
      %1108 = vrot.lane.b32.xlu0 %v671, 32
      %v1109 = vpop.permute.xlu0 %1108
      %1110 = vrot.lane.b32.xlu0 %v714, 32
      %v1111 = vpop.permute.xlu0 %1110
      %1112 = vrot.lane.b32.xlu0 %v716, 32
      %v1113 = vpop.permute.xlu0 %1112
      %1146 = vrot.lane.b32.xlu0 %v414, 64
      %v1147 = vpop.permute.xlu0 %1146
      %1148 = vrot.lane.b32.xlu0 %v415, 64
      %v1149 = vpop.permute.xlu0 %1148
      %1150 = vrot.lane.b32.xlu0 %v417, 64
      %v1151 = vpop.permute.xlu0 %1150
      %1152 = vrot.lane.b32.xlu0 %v418, 64
      %v1153 = vpop.permute.xlu0 %1152
      %1154 = vrot.lane.b32.xlu0 %v420, 64
      %v1155 = vpop.permute.xlu0 %1154
      %1156 = vrot.lane.b32.xlu0 %v421, 64
      %v1157 = vpop.permute.xlu0 %1156
      %1158 = vrot.lane.b32.xlu0 %v423, 64
      %v1159 = vpop.permute.xlu0 %1158
      %1160 = vrot.lane.b32.xlu0 %v424, 64
      %v1161 = vpop.permute.xlu0 %1160
      %1162 = vrot.lane.b32.xlu0 %v426, 64
      %v1163 = vpop.permute.xlu0 %1162
      %1164 = vrot.lane.b32.xlu0 %v427, 64
      %v1165 = vpop.permute.xlu0 %1164
      %1166 = vrot.lane.b32.xlu0 %v429, 64
      %v1167 = vpop.permute.xlu0 %1166
      %1168 = vrot.lane.b32.xlu0 %v430, 64
      %v1169 = vpop.permute.xlu0 %1168
      %1170 = vrot.lane.b32.xlu0 %v432, 64
      %v1171 = vpop.permute.xlu0 %1170
      %1172 = vrot.lane.b32.xlu0 %v433, 64
      %v1173 = vpop.permute.xlu0 %1172
      %1174 = vrot.lane.b32.xlu0 %v435, 64
      %v1175 = vpop.permute.xlu0 %1174
      %1176 = vrot.lane.b32.xlu0 %v436, 64
      %v1177 = vpop.permute.xlu0 %1176
      %1178 = vrot.lane.b32.xlu0 %v438, 64
      %v1179 = vpop.permute.xlu0 %1178
      %1180 = vrot.lane.b32.xlu0 %v439, 64
      %v1181 = vpop.permute.xlu0 %1180
      %1182 = vrot.lane.b32.xlu0 %v441, 64
      %v1183 = vpop.permute.xlu0 %1182
      %1184 = vrot.lane.b32.xlu0 %v442, 64
      %v1185 = vpop.permute.xlu0 %1184
      %1186 = vrot.lane.b32.xlu0 %v444, 64
      %v1187 = vpop.permute.xlu0 %1186
      %1188 = vrot.lane.b32.xlu0 %v445, 64
      %v1189 = vpop.permute.xlu0 %1188
      %1190 = vrot.lane.b32.xlu0 %v447, 64
      %v1191 = vpop.permute.xlu0 %1190
      %1192 = vrot.lane.b32.xlu0 %v448, 64
      %v1193 = vpop.permute.xlu0 %1192
      %1194 = vrot.lane.b32.xlu0 %v450, 64
      %v1195 = vpop.permute.xlu0 %1194
      %1196 = vrot.lane.b32.xlu0 %v451, 64
      %v1197 = vpop.permute.xlu0 %1196
      %1198 = vrot.lane.b32.xlu0 %v453, 64
      %v1199 = vpop.permute.xlu0 %1198
      %1200 = vrot.lane.b32.xlu0 %v454, 64
      %v1201 = vpop.permute.xlu0 %1200
      %1202 = vrot.lane.b32.xlu0 %v456, 64
      %v1203 = vpop.permute.xlu0 %1202
      %1204 = vrot.lane.b32.xlu0 %v457, 64
      %v1205 = vpop.permute.xlu0 %1204
      %1206 = vrot.lane.b32.xlu0 %v459, 64
      %v1207 = vpop.permute.xlu0 %1206
      %1208 = vrot.lane.b32.xlu0 %v460, 64
      %v1209 = vpop.permute.xlu0 %1208
      %1242 = vrot.lane.b32.xlu0 %v523, 96
      %v1243 = vpop.permute.xlu0 %1242
      %1244 = vrot.lane.b32.xlu0 %v525, 96
      %v1245 = vpop.permute.xlu0 %1244
      %1246 = vrot.lane.b32.xlu0 %v528, 96
      %v1247 = vpop.permute.xlu0 %1246
      %1248 = vrot.lane.b32.xlu0 %v530, 96
      %v1249 = vpop.permute.xlu0 %1248
      %1250 = vrot.lane.b32.xlu0 %v533, 96
      %v1251 = vpop.permute.xlu0 %1250
      %1252 = vrot.lane.b32.xlu0 %v535, 96
      %v1253 = vpop.permute.xlu0 %1252
      %1254 = vrot.lane.b32.xlu0 %v538, 96
      %v1255 = vpop.permute.xlu0 %1254
      %1256 = vrot.lane.b32.xlu0 %v540, 96
      %v1257 = vpop.permute.xlu0 %1256
      %1258 = vrot.lane.b32.xlu0 %v543, 96
      %v1259 = vpop.permute.xlu0 %1258
      %1260 = vrot.lane.b32.xlu0 %v545, 96
      %v1261 = vpop.permute.xlu0 %1260
      %1262 = vrot.lane.b32.xlu0 %v548, 96
      %v1263 = vpop.permute.xlu0 %1262
      %1264 = vrot.lane.b32.xlu0 %v550, 96
      %v1265 = vpop.permute.xlu0 %1264
      %1266 = vrot.lane.b32.xlu0 %v553, 96
      %v1267 = vpop.permute.xlu0 %1266
      %1268 = vrot.lane.b32.xlu0 %v555, 96
      %v1269 = vpop.permute.xlu0 %1268
      %1270 = vrot.lane.b32.xlu0 %v558, 96
      %v1271 = vpop.permute.xlu0 %1270
      %1272 = vrot.lane.b32.xlu0 %v560, 96
      %v1273 = vpop.permute.xlu0 %1272
      %1274 = vrot.lane.b32.xlu0 %v563, 96
      %v1275 = vpop.permute.xlu0 %1274
      %1276 = vrot.lane.b32.xlu0 %v565, 96
      %v1277 = vpop.permute.xlu0 %1276
      %1278 = vrot.lane.b32.xlu0 %v568, 96
      %v1279 = vpop.permute.xlu0 %1278
      %1280 = vrot.lane.b32.xlu0 %v570, 96
      %v1281 = vpop.permute.xlu0 %1280
      %1282 = vrot.lane.b32.xlu0 %v573, 96
      %v1283 = vpop.permute.xlu0 %1282
      %1284 = vrot.lane.b32.xlu0 %v575, 96
      %v1285 = vpop.permute.xlu0 %1284
      %1286 = vrot.lane.b32.xlu0 %v578, 96
      %v1287 = vpop.permute.xlu0 %1286
      %1288 = vrot.lane.b32.xlu0 %v580, 96
      %v1289 = vpop.permute.xlu0 %1288
      %1290 = vrot.lane.b32.xlu0 %v583, 96
      %v1291 = vpop.permute.xlu0 %1290
      %1292 = vrot.lane.b32.xlu0 %v585, 96
      %v1293 = vpop.permute.xlu0 %1292
      %1294 = vrot.lane.b32.xlu0 %v588, 96
      %v1295 = vpop.permute.xlu0 %1294
      %1296 = vrot.lane.b32.xlu0 %v590, 96
      %v1297 = vpop.permute.xlu0 %1296
      %1298 = vrot.lane.b32.xlu0 %v677, 96
      %v1299 = vpop.permute.xlu0 %1298
      %1300 = vrot.lane.b32.xlu0 %v679, 96
      %v1301 = vpop.permute.xlu0 %1300
      %1302 = vrot.lane.b32.xlu0 %v722, 96
      %v1303 = vpop.permute.xlu0 %1302
      %1304 = vrot.lane.b32.xlu0 %v724, 96
      %v1305 = vpop.permute.xlu0 %1304
      %vm1338 = vcmask 261120
      %v1339 = vsel %vm1338, %v408, %v763
      %v1340 = vsel %vm1338, %v409, %v765
      %v1341 = vsel %vm1338, %v411, %v767
      %v1342 = vsel %vm1338, %v412, %v769
      %v1343 = vsel %vm1338, %v414, %v771
      %v1344 = vsel %vm1338, %v415, %v773
      %v1345 = vsel %vm1338, %v417, %v775
      %v1346 = vsel %vm1338, %v418, %v777
      %v1347 = vsel %vm1338, %v420, %v779
      %v1348 = vsel %vm1338, %v421, %v781
      %v1349 = vsel %vm1338, %v423, %v783
      %v1350 = vsel %vm1338, %v424, %v785
      %v1351 = vsel %vm1338, %v426, %v787
      %v1352 = vsel %vm1338, %v427, %v789
      %v1353 = vsel %vm1338, %v429, %v791
      %v1354 = vsel %vm1338, %v430, %v793
      %v1355 = vsel %vm1338, %v432, %v795
      %v1356 = vsel %vm1338, %v433, %v797
      %v1357 = vsel %vm1338, %v435, %v799
      %v1358 = vsel %vm1338, %v436, %v801
      %v1359 = vsel %vm1338, %v438, %v803
      %v1360 = vsel %vm1338, %v439, %v805
      %v1361 = vsel %vm1338, %v441, %v807
      %v1362 = vsel %vm1338, %v442, %v809
      %v1363 = vsel %vm1338, %v444, %v811
      %v1364 = vsel %vm1338, %v445, %v813
      %v1365 = vsel %vm1338, %v447, %v815
      %v1366 = vsel %vm1338, %v448, %v817
      %v1367 = vsel %vm1338, %v450, %v819
      %v1368 = vsel %vm1338, %v451, %v821
      %v1369 = vsel %vm1338, %v453, %v823
      %v1370 = vsel %vm1338, %v454, %v825
      %vm1371 = vcmask 523264
      %v1372 = vsel %vm1371, %v1339, %v859
      %v1373 = vsel %vm1371, %v1340, %v861
      %v1374 = vsel %vm1371, %v1341, %v863
      %v1375 = vsel %vm1371, %v1342, %v865
      %v1376 = vsel %vm1371, %v1343, %v867
      %v1377 = vsel %vm1371, %v1344, %v869
      %v1378 = vsel %vm1371, %v1345, %v871
      %v1379 = vsel %vm1371, %v1346, %v873
      %v1380 = vsel %vm1371, %v1347, %v875
      %v1381 = vsel %vm1371, %v1348, %v877
      %v1382 = vsel %vm1371, %v1349, %v879
      %v1383 = vsel %vm1371, %v1350, %v881
      %v1384 = vsel %vm1371, %v1351, %v883
      %v1385 = vsel %vm1371, %v1352, %v885
      %v1386 = vsel %vm1371, %v1353, %v887
      %v1387 = vsel %vm1371, %v1354, %v889
      %v1388 = vsel %vm1371, %v1355, %v891
      %v1389 = vsel %vm1371, %v1356, %v893
      %v1390 = vsel %vm1371, %v1357, %v895
      %v1391 = vsel %vm1371, %v1358, %v897
      %v1392 = vsel %vm1371, %v1359, %v899
      %v1393 = vsel %vm1371, %v1360, %v901
      %v1394 = vsel %vm1371, %v1361, %v903
      %v1395 = vsel %vm1371, %v1362, %v905
      %v1396 = vsel %vm1371, %v1363, %v907
      %v1397 = vsel %vm1371, %v1364, %v909
      %v1398 = vsel %vm1371, %v1365, %v911
      %v1399 = vsel %vm1371, %v1366, %v913
      %v1400 = vsel %vm1371, %v1367, %v915
      %v1401 = vsel %vm1371, %v1368, %v917
      %v1402 = vsel %vm1371, %v1369, %v919
      %v1403 = vsel %vm1371, %v1370, %v921
      %vm1404 = vcmask 785408
      %v1405 = vsel %vm1404, %v1372, %v955
      %v1406 = vsel %vm1404, %v1373, %v957
      %v1407 = vsel %vm1404, %v1374, %v959
      %v1408 = vsel %vm1404, %v1375, %v961
      %v1409 = vsel %vm1404, %v1376, %v963
      %v1410 = vsel %vm1404, %v1377, %v965
      %v1411 = vsel %vm1404, %v1378, %v967
      %v1412 = vsel %vm1404, %v1379, %v969
      %v1413 = vsel %vm1404, %v1380, %v971
      %v1414 = vsel %vm1404, %v1381, %v973
      %v1415 = vsel %vm1404, %v1382, %v975
      %v1416 = vsel %vm1404, %v1383, %v977
      %v1417 = vsel %vm1404, %v1384, %v979
      %v1418 = vsel %vm1404, %v1385, %v981
      %v1419 = vsel %vm1404, %v1386, %v983
      %v1420 = vsel %vm1404, %v1387, %v985
      %v1421 = vsel %vm1404, %v1388, %v987
      %v1422 = vsel %vm1404, %v1389, %v989
      %v1423 = vsel %vm1404, %v1390, %v991
      %v1424 = vsel %vm1404, %v1391, %v993
      %v1425 = vsel %vm1404, %v1392, %v995
      %v1426 = vsel %vm1404, %v1393, %v997
      %v1427 = vsel %vm1404, %v1394, %v999
      %v1428 = vsel %vm1404, %v1395, %v1001
      %v1429 = vsel %vm1404, %v1396, %v1003
      %v1430 = vsel %vm1404, %v1397, %v1005
      %v1431 = vsel %vm1404, %v1398, %v1007
      %v1432 = vsel %vm1404, %v1399, %v1009
      %v1433 = vsel %vm1404, %v1400, %v1011
      %v1434 = vsel %vm1404, %v1401, %v1013
      %v1435 = vsel %vm1404, %v1402, %v1015
      %v1436 = vsel %vm1404, %v1403, %v1017
      %v1437 = vsel %vm1338, %v518, %v1051
      %v1438 = vsel %vm1338, %v520, %v1053
      %v1439 = vsel %vm1338, %v523, %v1055
      %v1440 = vsel %vm1338, %v525, %v1057
      %v1441 = vsel %vm1338, %v528, %v1059
      %v1442 = vsel %vm1338, %v530, %v1061
      %v1443 = vsel %vm1338, %v533, %v1063
      %v1444 = vsel %vm1338, %v535, %v1065
      %v1445 = vsel %vm1338, %v538, %v1067
      %v1446 = vsel %vm1338, %v540, %v1069
      %v1447 = vsel %vm1338, %v543, %v1071
      %v1448 = vsel %vm1338, %v545, %v1073
      %v1449 = vsel %vm1338, %v548, %v1075
      %v1450 = vsel %vm1338, %v550, %v1077
      %v1451 = vsel %vm1338, %v553, %v1079
      %v1452 = vsel %vm1338, %v555, %v1081
      %v1453 = vsel %vm1338, %v558, %v1083
      %v1454 = vsel %vm1338, %v560, %v1085
      %v1455 = vsel %vm1338, %v563, %v1087
      %v1456 = vsel %vm1338, %v565, %v1089
      %v1457 = vsel %vm1338, %v568, %v1091
      %v1458 = vsel %vm1338, %v570, %v1093
      %v1459 = vsel %vm1338, %v573, %v1095
      %v1460 = vsel %vm1338, %v575, %v1097
      %v1461 = vsel %vm1338, %v578, %v1099
      %v1462 = vsel %vm1338, %v580, %v1101
      %v1463 = vsel %vm1338, %v583, %v1103
      %v1464 = vsel %vm1338, %v585, %v1105
      %v1465 = vsel %vm1338, %v588, %v1107
      %v1466 = vsel %vm1338, %v590, %v1109
      %v1467 = vsel %vm1338, %v677, %v1111
      %v1468 = vsel %vm1338, %v679, %v1113
      %v1469 = vsel %vm1371, %v1437, %v1147
      %v1470 = vsel %vm1371, %v1438, %v1149
      %v1471 = vsel %vm1371, %v1439, %v1151
      %v1472 = vsel %vm1371, %v1440, %v1153
      %v1473 = vsel %vm1371, %v1441, %v1155
      %v1474 = vsel %vm1371, %v1442, %v1157
      %v1475 = vsel %vm1371, %v1443, %v1159
      %v1476 = vsel %vm1371, %v1444, %v1161
      %v1477 = vsel %vm1371, %v1445, %v1163
      %v1478 = vsel %vm1371, %v1446, %v1165
      %v1479 = vsel %vm1371, %v1447, %v1167
      %v1480 = vsel %vm1371, %v1448, %v1169
      %v1481 = vsel %vm1371, %v1449, %v1171
      %v1482 = vsel %vm1371, %v1450, %v1173
      %v1483 = vsel %vm1371, %v1451, %v1175
      %v1484 = vsel %vm1371, %v1452, %v1177
      %v1485 = vsel %vm1371, %v1453, %v1179
      %v1486 = vsel %vm1371, %v1454, %v1181
      %v1487 = vsel %vm1371, %v1455, %v1183
      %v1488 = vsel %vm1371, %v1456, %v1185
      %v1489 = vsel %vm1371, %v1457, %v1187
      %v1490 = vsel %vm1371, %v1458, %v1189
      %v1491 = vsel %vm1371, %v1459, %v1191
      %v1492 = vsel %vm1371, %v1460, %v1193
      %v1493 = vsel %vm1371, %v1461, %v1195
      %v1494 = vsel %vm1371, %v1462, %v1197
      %v1495 = vsel %vm1371, %v1463, %v1199
      %v1496 = vsel %vm1371, %v1464, %v1201
      %v1497 = vsel %vm1371, %v1465, %v1203
      %v1498 = vsel %vm1371, %v1466, %v1205
      %v1499 = vsel %vm1371, %v1467, %v1207
      %v1500 = vsel %vm1371, %v1468, %v1209
      %v1501 = vsel %vm1404, %v1469, %v1243
      %v1502 = vsel %vm1404, %v1470, %v1245
      %v1503 = vsel %vm1404, %v1471, %v1247
      %v1504 = vsel %vm1404, %v1472, %v1249
      %v1505 = vsel %vm1404, %v1473, %v1251
      %v1506 = vsel %vm1404, %v1474, %v1253
      %v1507 = vsel %vm1404, %v1475, %v1255
      %v1508 = vsel %vm1404, %v1476, %v1257
      %v1509 = vsel %vm1404, %v1477, %v1259
      %v1510 = vsel %vm1404, %v1478, %v1261
      %v1511 = vsel %vm1404, %v1479, %v1263
      %v1512 = vsel %vm1404, %v1480, %v1265
      %v1513 = vsel %vm1404, %v1481, %v1267
      %v1514 = vsel %vm1404, %v1482, %v1269
      %v1515 = vsel %vm1404, %v1483, %v1271
      %v1516 = vsel %vm1404, %v1484, %v1273
      %v1517 = vsel %vm1404, %v1485, %v1275
      %v1518 = vsel %vm1404, %v1486, %v1277
      %v1519 = vsel %vm1404, %v1487, %v1279
      %v1520 = vsel %vm1404, %v1488, %v1281
      %v1521 = vsel %vm1404, %v1489, %v1283
      %v1522 = vsel %vm1404, %v1490, %v1285
      %v1523 = vsel %vm1404, %v1491, %v1287
      %v1524 = vsel %vm1404, %v1492, %v1289
      %v1525 = vsel %vm1404, %v1493, %v1291
      %v1526 = vsel %vm1404, %v1494, %v1293
      %v1527 = vsel %vm1404, %v1495, %v1295
      %v1528 = vsel %vm1404, %v1496, %v1297
      %v1529 = vsel %vm1404, %v1497, %v1299
      %v1530 = vsel %vm1404, %v1498, %v1301
      %v1531 = vsel %vm1404, %v1499, %v1303
      %v1532 = vsel %vm1404, %v1500, %v1305
      %v1533 = vpack.c.bf16 %v1406, %v1405
      %v1534 = vpack.c.bf16 %v1502, %v1501
      %v1535 = vpack.c.bf16 %v606, %v604
      %v1536 = vpack.c.bf16 %v1408, %v1407
      %v1537 = vpack.c.bf16 %v1504, %v1503
      %v1538 = vpack.c.bf16 %v611, %v609
      %v1539 = vpack.c.bf16 %v1410, %v1409
      %v1540 = vpack.c.bf16 %v1506, %v1505
      %v1541 = vpack.c.bf16 %v616, %v614
      %v1542 = vpack.c.bf16 %v1412, %v1411
      %v1543 = vpack.c.bf16 %v1508, %v1507
      %v1544 = vpack.c.bf16 %v621, %v619
      %v1545 = vpack.c.bf16 %v1414, %v1413
      %v1546 = vpack.c.bf16 %v1510, %v1509
      %v1547 = vpack.c.bf16 %v626, %v624
      %v1548 = vpack.c.bf16 %v1416, %v1415
      %v1549 = vpack.c.bf16 %v1512, %v1511
      %v1550 = vpack.c.bf16 %v631, %v629
      %v1551 = vpack.c.bf16 %v1418, %v1417
      %v1552 = vpack.c.bf16 %v1514, %v1513
      %v1553 = vpack.c.bf16 %v636, %v634
      %v1554 = vpack.c.bf16 %v1420, %v1419
      %v1555 = vpack.c.bf16 %v1516, %v1515
      %v1556 = vpack.c.bf16 %v641, %v639
      %v1557 = vpack.c.bf16 %v1422, %v1421
      %v1558 = vpack.c.bf16 %v1518, %v1517
      %v1559 = vpack.c.bf16 %v646, %v644
      %v1560 = vpack.c.bf16 %v1424, %v1423
      %v1561 = vpack.c.bf16 %v1520, %v1519
      %v1562 = vpack.c.bf16 %v651, %v649
      %v1563 = vpack.c.bf16 %v1426, %v1425
      %v1564 = vpack.c.bf16 %v1522, %v1521
      %v1565 = vpack.c.bf16 %v656, %v654
      %v1566 = vpack.c.bf16 %v1428, %v1427
      %v1567 = vpack.c.bf16 %v1524, %v1523
      %v1568 = vpack.c.bf16 %v661, %v659
      %v1569 = vpack.c.bf16 %v1430, %v1429
      %v1570 = vpack.c.bf16 %v1526, %v1525
      %v1571 = vpack.c.bf16 %v666, %v664
      %v1572 = vpack.c.bf16 %v1432, %v1431
      %v1573 = vpack.c.bf16 %v1528, %v1527
      %v1574 = vpack.c.bf16 %v671, %v669
      %v1575 = vpack.c.bf16 %v1434, %v1433
      %v1576 = vpack.c.bf16 %v1530, %v1529
      %v1577 = vpack.c.bf16 %v716, %v714
      %v1578 = vpack.c.bf16 %v1436, %v1435
      %v1579 = vpack.c.bf16 %v1532, %v1531
      %v1580 = vpack.c.bf16 %v729, %v727
      %v1581 = vld [vmem:[%s2] sm:$0xf]
      %v1582 = vld [vmem:[%s2 + $0x4] sm:$0xf]
      %v1583 = vld [vmem:[%s2 + $0x8] sm:$0xf]
      %v1584 = vld [vmem:[%s2 + $0xc] sm:$0xf]
      %v1585 = vld [vmem:[%s2 + $0x10] sm:$0xf]
      %v1586 = vld [vmem:[%s2 + $0x14] sm:$0xf]
      %v1587 = vld [vmem:[%s2 + $0x18] sm:$0xf]
      %v1588 = vld [vmem:[%s2 + $0x1c] sm:$0xf]
      %v1589 = vld [vmem:[%s2 + $0x20] sm:$0xf]
      %v1590 = vld [vmem:[%s2 + $0x24] sm:$0xf]
      %v1591 = vld [vmem:[%s2 + $0x28] sm:$0xf]
      %v1592 = vld [vmem:[%s2 + $0x2c] sm:$0xf]
      %v1593 = vld [vmem:[%s2 + $0x30] sm:$0xf]
      %v1594 = vld [vmem:[%s2 + $0x34] sm:$0xf]
      %v1595 = vld [vmem:[%s2 + $0x38] sm:$0xf]
      %v1596 = vld [vmem:[%s2 + $0x3c] sm:$0xf]
      %v1597 = vld [vmem:[%s2 + $0x40] sm:$0xf]
      %v1598 = vld [vmem:[%s2 + $0x44] sm:$0xf]
      %v1599 = vld [vmem:[%s2 + $0x48] sm:$0xf]
      %v1600 = vld [vmem:[%s2 + $0x4c] sm:$0xf]
      %v1601 = vld [vmem:[%s2 + $0x50] sm:$0xf]
      %v1602 = vld [vmem:[%s2 + $0x54] sm:$0xf]
      %v1603 = vld [vmem:[%s2 + $0x58] sm:$0xf]
      %v1604 = vld [vmem:[%s2 + $0x5c] sm:$0xf]
      %v1605 = vld [vmem:[%s2 + $0x60] sm:$0xf]
      %v1606 = vld [vmem:[%s2 + $0x64] sm:$0xf]
      %v1607 = vld [vmem:[%s2 + $0x68] sm:$0xf]
      %v1608 = vld [vmem:[%s2 + $0x6c] sm:$0xf]
      %v1609 = vld [vmem:[%s2 + $0x70] sm:$0xf]
      %v1610 = vld [vmem:[%s2 + $0x74] sm:$0xf]
      %v1611 = vld [vmem:[%s2 + $0x78] sm:$0xf]
      %v1612 = vld [vmem:[%s2 + $0x7c] sm:$0xf]
      %v1613 = vld [vmem:[%s2 + $0x80] sm:$0xf]
      %v1614 = vld [vmem:[%s2 + $0x84] sm:$0xf]
      %v1615 = vld [vmem:[%s2 + $0x88] sm:$0xf]
      %v1616 = vld [vmem:[%s2 + $0x8c] sm:$0xf]
      %v1617 = vld [vmem:[%s3] sm:$0xff]
      %v1618 = vld [vmem:[%s3 + $0x8] sm:$0xff]
      %v1619 = vld [vmem:[%s3 + $0x10] sm:$0xff]
      %v1620 = vld [vmem:[%s3 + $0x18] sm:$0xff]
      %v1621 = vld [vmem:[%s3 + $0x20] sm:$0xff]
      %v1622 = vld [vmem:[%s3 + $0x28] sm:$0xff]
      %v1623 = vld [vmem:[%s3 + $0x30] sm:$0xff]
      %v1624 = vld [vmem:[%s3 + $0x38] sm:$0xff]
      %v1625 = vld [vmem:[%s3 + $0x40] sm:$0xff]
      %v1626 = vld [vmem:[%s3 + $0x48] sm:$0xff]
      %v1627 = vld [vmem:[%s3 + $0x50] sm:$0xff]
      %v1628 = vld [vmem:[%s3 + $0x58] sm:$0xff]
      %v1629 = vld [vmem:[%s3 + $0x60] sm:$0xff]
      %v1630 = vld [vmem:[%s3 + $0x68] sm:$0xff]
      %v1631 = vld [vmem:[%s3 + $0x70] sm:$0xff]
      %v1632 = vld [vmem:[%s3 + $0x78] sm:$0xff]
      %v1633 = vld [vmem:[%s3 + $0x80] sm:$0xff]
      %v1634 = vld [vmem:[%s3 + $0x88] sm:$0xff]
      %v1635 = vld [vmem:[%s3 + $0x90] sm:$0xff]
      %v1636 = vld [vmem:[%s3 + $0x98] sm:$0xff]
      %v1637 = vld [vmem:[%s3 + $0xa0] sm:$0xff]
      %v1638 = vld [vmem:[%s3 + $0xa8] sm:$0xff]
      %v1639 = vld [vmem:[%s3 + $0xb0] sm:$0xff]
      %v1640 = vld [vmem:[%s3 + $0xb8] sm:$0xff]
      %v1641 = vld [vmem:[%s3 + $0xc0] sm:$0xff]
      %v1642 = vld [vmem:[%s3 + $0xc8] sm:$0xff]
      %v1643 = vld [vmem:[%s3 + $0xd0] sm:$0xff]
      %v1644 = vld [vmem:[%s3 + $0xd8] sm:$0xff]
      %v1645 = vld [vmem:[%s3 + $0xe0] sm:$0xff]
      %v1646 = vld [vmem:[%s3 + $0xe8] sm:$0xff]
      %v1647 = vld [vmem:[%s3 + $0xf0] sm:$0xff]
      %v1648 = vld [vmem:[%s3 + $0xf8] sm:$0xff]
      %v1685 = vunpack.c.l.b16 %v1581
      %v1686 = vunpack.c.l.b16 %v1582
      %v1687 = vunpack.c.l.b16 %v1583
      %v1688 = vunpack.c.l.b16 %v1584
      %v1689 = vunpack.c.l.b16 %v1585
      %v1690 = vunpack.c.l.b16 %v1586
      %v1691 = vunpack.c.l.b16 %v1587
      %v1692 = vunpack.c.l.b16 %v1588
      %v1693 = vunpack.c.l.b16 %v1589
      %v1694 = vunpack.c.l.b16 %v1590
      %v1695 = vunpack.c.l.b16 %v1591
      %v1696 = vunpack.c.l.b16 %v1592
      %v1697 = vunpack.c.l.b16 %v1593
      %v1698 = vunpack.c.l.b16 %v1594
      %v1699 = vunpack.c.l.b16 %v1595
      %v1700 = vunpack.c.l.b16 %v1596
      %v1701 = vunpack.c.l.b16 %v1597
      %v1702 = vunpack.c.l.b16 %v1598
      %v1703 = vunpack.c.l.b16 %v1599
      %v1704 = vunpack.c.l.b16 %v1600
      %v1705 = vunpack.c.l.b16 %v1601
      %v1706 = vunpack.c.l.b16 %v1602
      %v1707 = vunpack.c.l.b16 %v1603
      %v1708 = vunpack.c.l.b16 %v1604
      %v1709 = vunpack.c.l.b16 %v1605
      %v1710 = vunpack.c.l.b16 %v1606
      %v1711 = vunpack.c.l.b16 %v1607
      %v1712 = vunpack.c.l.b16 %v1608
      %v1713 = vunpack.c.l.b16 %v1609
      %v1714 = vunpack.c.l.b16 %v1610
      %v1715 = vunpack.c.l.b16 %v1611
      %v1716 = vunpack.c.l.b16 %v1612
      %v1717 = vunpack.c.l.b16 %v1613
      %v1718 = vunpack.c.l.b16 %v1614
      %v1719 = vunpack.c.l.b16 %v1615
      %v1720 = vunpack.c.l.b16 %v1616
      %v1721 = vpack.c.b16 %v1686, %v1685
      %v1722 = vpack.c.b16 %v1688, %v1687
      %v1723 = vpack.c.b16 %v1690, %v1689
      %v1724 = vpack.c.b16 %v1692, %v1691
      %v1725 = vpack.c.b16 %v1694, %v1693
      %v1726 = vpack.c.b16 %v1696, %v1695
      %v1727 = vpack.c.b16 %v1698, %v1697
      %v1728 = vpack.c.b16 %v1700, %v1699
      %v1729 = vpack.c.b16 %v1702, %v1701
      %v1730 = vpack.c.b16 %v1704, %v1703
      %v1731 = vpack.c.b16 %v1706, %v1705
      %v1732 = vpack.c.b16 %v1708, %v1707
      %v1733 = vpack.c.b16 %v1710, %v1709
      %v1734 = vpack.c.b16 %v1712, %v1711
      %v1735 = vpack.c.b16 %v1714, %v1713
      %v1736 = vpack.c.b16 %v1716, %v1715
      %v1737 = vpack.c.b16 %v1718, %v1717
      %v1738 = vpack.c.b16 %v1720, %v1719
      %v1758 = vsel %vm1338, %v1535, 0
      %v1761 = vsel %vm1338, %v1538, 0
      %v1764 = vsel %vm1338, %v1541, 0
      %v1767 = vsel %vm1338, %v1544, 0
      %v1770 = vsel %vm1338, %v1547, 0
      %v1773 = vsel %vm1338, %v1550, 0
      %v1776 = vsel %vm1338, %v1553, 0
      %v1779 = vsel %vm1338, %v1556, 0
      %v1782 = vsel %vm1338, %v1559, 0
      %v1785 = vsel %vm1338, %v1562, 0
      %v1788 = vsel %vm1338, %v1565, 0
      %v1791 = vsel %vm1338, %v1568, 0
      %v1794 = vsel %vm1338, %v1571, 0
      %v1797 = vsel %vm1338, %v1574, 0
      %v1800 = vsel %vm1338, %v1577, 0
      %v1803 = vsel %vm1338, %v1580, 0
      %1805 = vmatpush.bf16.msra.mxu0 %v1728
      %1806 = vmatpush.bf16.msra.mxu0 %v1727
      %1807 = vmatpush.bf16.msra.mxu0 %v1726
      %1808 = vmatpush.bf16.msra.mxu0 %v1725
      %1809 = vmatpush.bf16.msra.mxu0 %v1724
      %1810 = vmatpush.bf16.msra.mxu0 %v1723
      %1811 = vmatpush.bf16.msra.mxu0 %v1722
      %1812 = vmatpush.bf16.msra.mxu0 %v1721
      %1813 = vmatmul.bf16.gmra.mxu0 %v1533
      %v1814 = vpop.f32.mrf.mxu0
      %v1815 = vadd.f32 %v1617, %v1814
      %v1816 = vpop.f32.mrf.mxu0
      %v1817 = vadd.f32 %v1618, %v1816
      %1818 = vmatmul.bf16.gmra.mxu0 %v1536
      %v1819 = vpop.f32.mrf.mxu0
      %v1820 = vadd.f32 %v1619, %v1819
      %v1821 = vpop.f32.mrf.mxu0
      %v1822 = vadd.f32 %v1620, %v1821
      %1823 = vmatmul.bf16.gmra.mxu0 %v1539
      %v1824 = vpop.f32.mrf.mxu0
      %v1825 = vadd.f32 %v1621, %v1824
      %v1826 = vpop.f32.mrf.mxu0
      %v1827 = vadd.f32 %v1622, %v1826
      %1828 = vmatmul.bf16.gmra.mxu0 %v1542
      %v1829 = vpop.f32.mrf.mxu0
      %v1830 = vadd.f32 %v1623, %v1829
      %v1831 = vpop.f32.mrf.mxu0
      %v1832 = vadd.f32 %v1624, %v1831
      %1833 = vmatmul.bf16.gmra.mxu0 %v1545
      %v1834 = vpop.f32.mrf.mxu0
      %v1835 = vadd.f32 %v1625, %v1834
      %v1836 = vpop.f32.mrf.mxu0
      %v1837 = vadd.f32 %v1626, %v1836
      %1838 = vmatmul.bf16.gmra.mxu0 %v1548
      %v1839 = vpop.f32.mrf.mxu0
      %v1840 = vadd.f32 %v1627, %v1839
      %v1841 = vpop.f32.mrf.mxu0
      %v1842 = vadd.f32 %v1628, %v1841
      %1843 = vmatmul.bf16.gmra.mxu0 %v1551
      %v1844 = vpop.f32.mrf.mxu0
      %v1845 = vadd.f32 %v1629, %v1844
      %v1846 = vpop.f32.mrf.mxu0
      %v1847 = vadd.f32 %v1630, %v1846
      %1848 = vmatmul.bf16.gmra.mxu0 %v1554
      %v1849 = vpop.f32.mrf.mxu0
      %v1850 = vadd.f32 %v1631, %v1849
      %v1851 = vpop.f32.mrf.mxu0
      %v1852 = vadd.f32 %v1632, %v1851
      %1853 = vmatmul.bf16.gmra.mxu0 %v1557
      %v1854 = vpop.f32.mrf.mxu0
      %v1855 = vadd.f32 %v1633, %v1854
      %v1856 = vpop.f32.mrf.mxu0
      %v1857 = vadd.f32 %v1634, %v1856
      %1858 = vmatmul.bf16.gmra.mxu0 %v1560
      %v1859 = vpop.f32.mrf.mxu0
      %v1860 = vadd.f32 %v1635, %v1859
      %v1861 = vpop.f32.mrf.mxu0
      %v1862 = vadd.f32 %v1636, %v1861
      %1863 = vmatmul.bf16.gmra.mxu0 %v1563
      %v1864 = vpop.f32.mrf.mxu0
      %v1865 = vadd.f32 %v1637, %v1864
      %v1866 = vpop.f32.mrf.mxu0
      %v1867 = vadd.f32 %v1638, %v1866
      %1868 = vmatmul.bf16.gmra.mxu0 %v1566
      %v1869 = vpop.f32.mrf.mxu0
      %v1870 = vadd.f32 %v1639, %v1869
      %v1871 = vpop.f32.mrf.mxu0
      %v1872 = vadd.f32 %v1640, %v1871
      %1873 = vmatmul.bf16.gmra.mxu0 %v1569
      %v1874 = vpop.f32.mrf.mxu0
      %v1875 = vadd.f32 %v1641, %v1874
      %v1876 = vpop.f32.mrf.mxu0
      %v1877 = vadd.f32 %v1642, %v1876
      %1878 = vmatmul.bf16.gmra.mxu0 %v1572
      %v1879 = vpop.f32.mrf.mxu0
      %v1880 = vadd.f32 %v1643, %v1879
      %v1881 = vpop.f32.mrf.mxu0
      %v1882 = vadd.f32 %v1644, %v1881
      %1883 = vmatmul.bf16.gmra.mxu0 %v1575
      %v1884 = vpop.f32.mrf.mxu0
      %v1885 = vadd.f32 %v1645, %v1884
      %v1886 = vpop.f32.mrf.mxu0
      %v1887 = vadd.f32 %v1646, %v1886
      %1888 = vmatmul.bf16.gmra.mxu0 %v1578
      %v1889 = vpop.f32.mrf.mxu0
      %v1890 = vadd.f32 %v1647, %v1889
      %v1891 = vpop.f32.mrf.mxu0
      %v1892 = vadd.f32 %v1648, %v1891
      %1893 = vdwg.mxu0
      %1894 = vmatpush.bf16.msra.mxu0 %v1736
      %1895 = vmatpush.bf16.msra.mxu0 %v1735
      %1896 = vmatpush.bf16.msra.mxu0 %v1734
      %1897 = vmatpush.bf16.msra.mxu0 %v1733
      %1898 = vmatpush.bf16.msra.mxu0 %v1732
      %1899 = vmatpush.bf16.msra.mxu0 %v1731
      %1900 = vmatpush.bf16.msra.mxu0 %v1730
      %1901 = vmatpush.bf16.msra.mxu0 %v1729
      %1902 = vmatmul.bf16.gmra.mxu0 %v1534
      %v1903 = vpop.f32.mrf.mxu0
      %v1904 = vadd.f32 %v1815, %v1903
      %v1905 = vpop.f32.mrf.mxu0
      %v1906 = vadd.f32 %v1817, %v1905
      %1907 = vmatmul.bf16.gmra.mxu0 %v1537
      %v1908 = vpop.f32.mrf.mxu0
      %v1909 = vadd.f32 %v1820, %v1908
      %v1910 = vpop.f32.mrf.mxu0
      %v1911 = vadd.f32 %v1822, %v1910
      %1912 = vmatmul.bf16.gmra.mxu0 %v1540
      %v1913 = vpop.f32.mrf.mxu0
      %v1914 = vadd.f32 %v1825, %v1913
      %v1915 = vpop.f32.mrf.mxu0
      %v1916 = vadd.f32 %v1827, %v1915
      %1917 = vmatmul.bf16.gmra.mxu0 %v1543
      %v1918 = vpop.f32.mrf.mxu0
      %v1919 = vadd.f32 %v1830, %v1918
      %v1920 = vpop.f32.mrf.mxu0
      %v1921 = vadd.f32 %v1832, %v1920
      %1922 = vmatmul.bf16.gmra.mxu0 %v1546
      %v1923 = vpop.f32.mrf.mxu0
      %v1924 = vadd.f32 %v1835, %v1923
      %v1925 = vpop.f32.mrf.mxu0
      %v1926 = vadd.f32 %v1837, %v1925
      %1927 = vmatmul.bf16.gmra.mxu0 %v1549
      %v1928 = vpop.f32.mrf.mxu0
      %v1929 = vadd.f32 %v1840, %v1928
      %v1930 = vpop.f32.mrf.mxu0
      %v1931 = vadd.f32 %v1842, %v1930
      %1932 = vmatmul.bf16.gmra.mxu0 %v1552
      %v1933 = vpop.f32.mrf.mxu0
      %v1934 = vadd.f32 %v1845, %v1933
      %v1935 = vpop.f32.mrf.mxu0
      %v1936 = vadd.f32 %v1847, %v1935
      %1937 = vmatmul.bf16.gmra.mxu0 %v1555
      %v1938 = vpop.f32.mrf.mxu0
      %v1939 = vadd.f32 %v1850, %v1938
      %v1940 = vpop.f32.mrf.mxu0
      %v1941 = vadd.f32 %v1852, %v1940
      %1942 = vmatmul.bf16.gmra.mxu0 %v1558
      %v1943 = vpop.f32.mrf.mxu0
      %v1944 = vadd.f32 %v1855, %v1943
      %v1945 = vpop.f32.mrf.mxu0
      %v1946 = vadd.f32 %v1857, %v1945
      %1947 = vmatmul.bf16.gmra.mxu0 %v1561
      %v1948 = vpop.f32.mrf.mxu0
      %v1949 = vadd.f32 %v1860, %v1948
      %v1950 = vpop.f32.mrf.mxu0
      %v1951 = vadd.f32 %v1862, %v1950
      %1952 = vmatmul.bf16.gmra.mxu0 %v1564
      %v1953 = vpop.f32.mrf.mxu0
      %v1954 = vadd.f32 %v1865, %v1953
      %v1955 = vpop.f32.mrf.mxu0
      %v1956 = vadd.f32 %v1867, %v1955
      %1957 = vmatmul.bf16.gmra.mxu0 %v1567
      %v1958 = vpop.f32.mrf.mxu0
      %v1959 = vadd.f32 %v1870, %v1958
      %v1960 = vpop.f32.mrf.mxu0
      %v1961 = vadd.f32 %v1872, %v1960
      %1962 = vmatmul.bf16.gmra.mxu0 %v1570
      %v1963 = vpop.f32.mrf.mxu0
      %v1964 = vadd.f32 %v1875, %v1963
      %v1965 = vpop.f32.mrf.mxu0
      %v1966 = vadd.f32 %v1877, %v1965
      %1967 = vmatmul.bf16.gmra.mxu0 %v1573
      %v1968 = vpop.f32.mrf.mxu0
      %v1969 = vadd.f32 %v1880, %v1968
      %v1970 = vpop.f32.mrf.mxu0
      %v1971 = vadd.f32 %v1882, %v1970
      %1972 = vmatmul.bf16.gmra.mxu0 %v1576
      %v1973 = vpop.f32.mrf.mxu0
      %v1974 = vadd.f32 %v1885, %v1973
      %v1975 = vpop.f32.mrf.mxu0
      %v1976 = vadd.f32 %v1887, %v1975
      %1977 = vmatmul.bf16.gmra.mxu0 %v1579
      %v1978 = vpop.f32.mrf.mxu0
      %v1979 = vadd.f32 %v1890, %v1978
      %v1980 = vpop.f32.mrf.mxu0
      %v1981 = vadd.f32 %v1892, %v1980
      %1982 = vdwg.mxu0
      %1983 = vmatpush.bf16.msra.mxu0 0
      %1984 = vmatpush.bf16.msra.mxu0 0
      %1985 = vmatpush.bf16.msra.mxu0 0
      %1986 = vmatpush.bf16.msra.mxu0 0
      %1987 = vmatpush.bf16.msra.mxu0 0
      %1988 = vmatpush.bf16.msra.mxu0 0
      %1989 = vmatpush.bf16.msra.mxu0 %v1738
      %1990 = vmatpush.bf16.msra.mxu0 %v1737
      %1991 = vmatmul.bf16.gmra.mxu0 %v1758
      %v1992 = vpop.f32.mrf.mxu0
      %v1993 = vadd.f32 %v1904, %v1992
      %v1994 = vpop.f32.mrf.mxu0
      %v1995 = vadd.f32 %v1906, %v1994
      %1996 = vmatmul.bf16.gmra.mxu0 %v1761
      %v1997 = vpop.f32.mrf.mxu0
      %v1998 = vadd.f32 %v1909, %v1997
      %v1999 = vpop.f32.mrf.mxu0
      %v2000 = vadd.f32 %v1911, %v1999
      %2001 = vmatmul.bf16.gmra.mxu0 %v1764
      %v2002 = vpop.f32.mrf.mxu0
      %v2003 = vadd.f32 %v1914, %v2002
      %v2004 = vpop.f32.mrf.mxu0
      %v2005 = vadd.f32 %v1916, %v2004
      %2006 = vmatmul.bf16.gmra.mxu0 %v1767
      %v2007 = vpop.f32.mrf.mxu0
      %v2008 = vadd.f32 %v1919, %v2007
      %v2009 = vpop.f32.mrf.mxu0
      %v2010 = vadd.f32 %v1921, %v2009
      %2011 = vmatmul.bf16.gmra.mxu0 %v1770
      %v2012 = vpop.f32.mrf.mxu0
      %v2013 = vadd.f32 %v1924, %v2012
      %v2014 = vpop.f32.mrf.mxu0
      %v2015 = vadd.f32 %v1926, %v2014
      %2016 = vmatmul.bf16.gmra.mxu0 %v1773
      %v2017 = vpop.f32.mrf.mxu0
      %v2018 = vadd.f32 %v1929, %v2017
      %v2019 = vpop.f32.mrf.mxu0
      %v2020 = vadd.f32 %v1931, %v2019
      %2021 = vmatmul.bf16.gmra.mxu0 %v1776
      %v2022 = vpop.f32.mrf.mxu0
      %v2023 = vadd.f32 %v1934, %v2022
      %v2024 = vpop.f32.mrf.mxu0
      %v2025 = vadd.f32 %v1936, %v2024
      %2026 = vmatmul.bf16.gmra.mxu0 %v1779
      %v2027 = vpop.f32.mrf.mxu0
      %v2028 = vadd.f32 %v1939, %v2027
      %v2029 = vpop.f32.mrf.mxu0
      %v2030 = vadd.f32 %v1941, %v2029
      %2031 = vmatmul.bf16.gmra.mxu0 %v1782
      %v2032 = vpop.f32.mrf.mxu0
      %v2033 = vadd.f32 %v1944, %v2032
      %v2034 = vpop.f32.mrf.mxu0
      %v2035 = vadd.f32 %v1946, %v2034
      %2036 = vmatmul.bf16.gmra.mxu0 %v1785
      %v2037 = vpop.f32.mrf.mxu0
      %v2038 = vadd.f32 %v1949, %v2037
      %v2039 = vpop.f32.mrf.mxu0
      %v2040 = vadd.f32 %v1951, %v2039
      %2041 = vmatmul.bf16.gmra.mxu0 %v1788
      %v2042 = vpop.f32.mrf.mxu0
      %v2043 = vadd.f32 %v1954, %v2042
      %v2044 = vpop.f32.mrf.mxu0
      %v2045 = vadd.f32 %v1956, %v2044
      %2046 = vmatmul.bf16.gmra.mxu0 %v1791
      %v2047 = vpop.f32.mrf.mxu0
      %v2048 = vadd.f32 %v1959, %v2047
      %v2049 = vpop.f32.mrf.mxu0
      %v2050 = vadd.f32 %v1961, %v2049
      %2051 = vmatmul.bf16.gmra.mxu0 %v1794
      %v2052 = vpop.f32.mrf.mxu0
      %v2053 = vadd.f32 %v1964, %v2052
      %v2054 = vpop.f32.mrf.mxu0
      %v2055 = vadd.f32 %v1966, %v2054
      %2056 = vmatmul.bf16.gmra.mxu0 %v1797
      %v2057 = vpop.f32.mrf.mxu0
      %v2058 = vadd.f32 %v1969, %v2057
      %v2059 = vpop.f32.mrf.mxu0
      %v2060 = vadd.f32 %v1971, %v2059
      %2061 = vmatmul.bf16.gmra.mxu0 %v1800
      %v2062 = vpop.f32.mrf.mxu0
      %v2063 = vadd.f32 %v1974, %v2062
      %v2064 = vpop.f32.mrf.mxu0
      %v2065 = vadd.f32 %v1976, %v2064
      %2066 = vmatmul.bf16.gmra.mxu0 %v1803
      %v2067 = vpop.f32.mrf.mxu0
      %v2068 = vadd.f32 %v1979, %v2067
      %v2069 = vpop.f32.mrf.mxu0
      %v2070 = vadd.f32 %v1981, %v2069
      %2071 = vdwg.mxu0
      %v2072 = vld [vmem:[%s401] sm:$0xff]
      %v2073 = vld [vmem:[%s401 + $0x8] sm:$0xff]
      %v2074 = vld [vmem:[%s401 + $0x10] sm:$0xff]
      %v2075 = vld [vmem:[%s401 + $0x18] sm:$0xff]
      %v2076 = vld [vmem:[%s401 + $0x20] sm:$0xff]
      %v2077 = vld [vmem:[%s401 + $0x28] sm:$0xff]
      %v2078 = vld [vmem:[%s401 + $0x30] sm:$0xff]
      %v2079 = vld [vmem:[%s401 + $0x38] sm:$0xff]
      %v2080 = vld [vmem:[%s401 + $0x40] sm:$0xff]
      %v2081 = vld [vmem:[%s401 + $0x48] sm:$0xff]
      %v2082 = vld [vmem:[%s401 + $0x50] sm:$0xff]
      %v2083 = vld [vmem:[%s401 + $0x58] sm:$0xff]
      %v2084 = vld [vmem:[%s401 + $0x60] sm:$0xff]
      %v2085 = vld [vmem:[%s401 + $0x68] sm:$0xff]
      %v2086 = vld [vmem:[%s401 + $0x70] sm:$0xff]
      %v2087 = vld [vmem:[%s401 + $0x78] sm:$0xff]
      %v2088 = vld [vmem:[%s401 + $0x80] sm:$0xff]
      %v2089 = vld [vmem:[%s401 + $0x88] sm:$0xff]
      %v2090 = vld [vmem:[%s401 + $0x90] sm:$0xff]
      %v2091 = vld [vmem:[%s401 + $0x98] sm:$0xff]
      %v2108 = vrot.slane %v2072, 1
      %v2109 = vrot.slane %v2073, 1
      %v2110 = vsel %vm510, %v2108, %v2109
      %v2111 = vrot.slane %v2074, 1
      %v2112 = vrot.slane %v2075, 1
      %v2113 = vsel %vm510, %v2111, %v2112
      %v2114 = vrot.slane %v2076, 1
      %v2115 = vrot.slane %v2077, 1
      %v2116 = vsel %vm510, %v2114, %v2115
      %v2117 = vrot.slane %v2078, 1
      %v2118 = vrot.slane %v2079, 1
      %v2119 = vsel %vm510, %v2117, %v2118
      %v2120 = vrot.slane %v2080, 1
      %v2121 = vrot.slane %v2081, 1
      %v2122 = vsel %vm510, %v2120, %v2121
      %v2123 = vrot.slane %v2082, 1
      %v2124 = vrot.slane %v2083, 1
      %v2125 = vsel %vm510, %v2123, %v2124
      %v2126 = vrot.slane %v2084, 1
      %v2127 = vrot.slane %v2085, 1
      %v2128 = vsel %vm510, %v2126, %v2127
      %v2129 = vrot.slane %v2086, 1
      %v2130 = vrot.slane %v2087, 1
      %v2131 = vsel %vm510, %v2129, %v2130
      %v2132 = vrot.slane %v2072, 2
      %v2133 = vrot.slane %v2073, 2
      %v2134 = vsel %vm591, %v2132, %v2133
      %v2135 = vrot.slane %v2074, 2
      %v2136 = vrot.slane %v2075, 2
      %v2137 = vsel %vm591, %v2135, %v2136
      %v2138 = vrot.slane %v2076, 2
      %v2139 = vrot.slane %v2077, 2
      %v2140 = vsel %vm591, %v2138, %v2139
      %v2141 = vrot.slane %v2078, 2
      %v2142 = vrot.slane %v2079, 2
      %v2143 = vsel %vm591, %v2141, %v2142
      %v2144 = vrot.slane %v2080, 2
      %v2145 = vrot.slane %v2081, 2
      %v2146 = vsel %vm591, %v2144, %v2145
      %v2147 = vrot.slane %v2082, 2
      %v2148 = vrot.slane %v2083, 2
      %v2149 = vsel %vm591, %v2147, %v2148
      %v2150 = vrot.slane %v2084, 2
      %v2151 = vrot.slane %v2085, 2
      %v2152 = vsel %vm591, %v2150, %v2151
      %v2153 = vrot.slane %v2086, 2
      %v2154 = vrot.slane %v2087, 2
      %v2155 = vsel %vm591, %v2153, %v2154
      %v2158 = vrot.slane %v2088, 1
      %v2159 = vrot.slane %v2089, 1
      %v2160 = vsel %vm510, %v2158, %v2159
      %v2169 = vrot.slane %v2088, 2
      %v2170 = vrot.slane %v2089, 2
      %v2171 = vsel %vm591, %v2169, %v2170
      %v2174 = vrot.slane %v2090, 1
      %v2175 = vrot.slane %v2091, 1
      %v2176 = vsel %vm510, %v2174, %v2175
      %v2177 = vrot.slane %v2090, 2
      %v2178 = vrot.slane %v2091, 2
      %v2179 = vsel %vm591, %v2177, %v2178
      %2188 = vrot.lane.b32.xlu0 %v2110, 32
      %v2189 = vpop.permute.xlu0 %2188
      %2190 = vrot.lane.b32.xlu0 %v2113, 32
      %v2191 = vpop.permute.xlu0 %2190
      %2192 = vrot.lane.b32.xlu0 %v2116, 32
      %v2193 = vpop.permute.xlu0 %2192
      %2194 = vrot.lane.b32.xlu0 %v2119, 32
      %v2195 = vpop.permute.xlu0 %2194
      %2196 = vrot.lane.b32.xlu0 %v2122, 32
      %v2197 = vpop.permute.xlu0 %2196
      %2198 = vrot.lane.b32.xlu0 %v2125, 32
      %v2199 = vpop.permute.xlu0 %2198
      %2200 = vrot.lane.b32.xlu0 %v2128, 32
      %v2201 = vpop.permute.xlu0 %2200
      %2202 = vrot.lane.b32.xlu0 %v2131, 32
      %v2203 = vpop.permute.xlu0 %2202
      %2212 = vrot.lane.b32.xlu0 %v2134, 64
      %v2213 = vpop.permute.xlu0 %2212
      %2214 = vrot.lane.b32.xlu0 %v2137, 64
      %v2215 = vpop.permute.xlu0 %2214
      %2216 = vrot.lane.b32.xlu0 %v2140, 64
      %v2217 = vpop.permute.xlu0 %2216
      %2218 = vrot.lane.b32.xlu0 %v2143, 64
      %v2219 = vpop.permute.xlu0 %2218
      %2220 = vrot.lane.b32.xlu0 %v2146, 64
      %v2221 = vpop.permute.xlu0 %2220
      %2222 = vrot.lane.b32.xlu0 %v2149, 64
      %v2223 = vpop.permute.xlu0 %2222
      %2224 = vrot.lane.b32.xlu0 %v2152, 64
      %v2225 = vpop.permute.xlu0 %2224
      %2226 = vrot.lane.b32.xlu0 %v2155, 64
      %v2227 = vpop.permute.xlu0 %2226
      %2236 = vrot.lane.b32.xlu0 %v2074, 96
      %v2237 = vpop.permute.xlu0 %2236
      %2238 = vrot.lane.b32.xlu0 %v2076, 96
      %v2239 = vpop.permute.xlu0 %2238
      %2240 = vrot.lane.b32.xlu0 %v2078, 96
      %v2241 = vpop.permute.xlu0 %2240
      %2242 = vrot.lane.b32.xlu0 %v2080, 96
      %v2243 = vpop.permute.xlu0 %2242
      %2244 = vrot.lane.b32.xlu0 %v2082, 96
      %v2245 = vpop.permute.xlu0 %2244
      %2246 = vrot.lane.b32.xlu0 %v2084, 96
      %v2247 = vpop.permute.xlu0 %2246
      %2248 = vrot.lane.b32.xlu0 %v2086, 96
      %v2249 = vpop.permute.xlu0 %2248
      %2250 = vrot.lane.b32.xlu0 %v2088, 96
      %v2251 = vpop.permute.xlu0 %2250
      %2260 = vrot.lane.b32.xlu0 %v2137, 32
      %v2261 = vpop.permute.xlu0 %2260
      %2262 = vrot.lane.b32.xlu0 %v2140, 32
      %v2263 = vpop.permute.xlu0 %2262
      %2264 = vrot.lane.b32.xlu0 %v2143, 32
      %v2265 = vpop.permute.xlu0 %2264
      %2266 = vrot.lane.b32.xlu0 %v2146, 32
      %v2267 = vpop.permute.xlu0 %2266
      %2268 = vrot.lane.b32.xlu0 %v2149, 32
      %v2269 = vpop.permute.xlu0 %2268
      %2270 = vrot.lane.b32.xlu0 %v2152, 32
      %v2271 = vpop.permute.xlu0 %2270
      %2272 = vrot.lane.b32.xlu0 %v2155, 32
      %v2273 = vpop.permute.xlu0 %2272
      %2274 = vrot.lane.b32.xlu0 %v2171, 32
      %v2275 = vpop.permute.xlu0 %2274
      %2284 = vrot.lane.b32.xlu0 %v2076, 64
      %v2285 = vpop.permute.xlu0 %2284
      %2286 = vrot.lane.b32.xlu0 %v2078, 64
      %v2287 = vpop.permute.xlu0 %2286
      %2288 = vrot.lane.b32.xlu0 %v2080, 64
      %v2289 = vpop.permute.xlu0 %2288
      %2290 = vrot.lane.b32.xlu0 %v2082, 64
      %v2291 = vpop.permute.xlu0 %2290
      %2292 = vrot.lane.b32.xlu0 %v2084, 64
      %v2293 = vpop.permute.xlu0 %2292
      %2294 = vrot.lane.b32.xlu0 %v2086, 64
      %v2295 = vpop.permute.xlu0 %2294
      %2296 = vrot.lane.b32.xlu0 %v2088, 64
      %v2297 = vpop.permute.xlu0 %2296
      %2298 = vrot.lane.b32.xlu0 %v2090, 64
      %v2299 = vpop.permute.xlu0 %2298
      %2308 = vrot.lane.b32.xlu0 %v2116, 96
      %v2309 = vpop.permute.xlu0 %2308
      %2310 = vrot.lane.b32.xlu0 %v2119, 96
      %v2311 = vpop.permute.xlu0 %2310
      %2312 = vrot.lane.b32.xlu0 %v2122, 96
      %v2313 = vpop.permute.xlu0 %2312
      %2314 = vrot.lane.b32.xlu0 %v2125, 96
      %v2315 = vpop.permute.xlu0 %2314
      %2316 = vrot.lane.b32.xlu0 %v2128, 96
      %v2317 = vpop.permute.xlu0 %2316
      %2318 = vrot.lane.b32.xlu0 %v2131, 96
      %v2319 = vpop.permute.xlu0 %2318
      %2320 = vrot.lane.b32.xlu0 %v2160, 96
      %v2321 = vpop.permute.xlu0 %2320
      %2322 = vrot.lane.b32.xlu0 %v2176, 96
      %v2323 = vpop.permute.xlu0 %2322
      %v2332 = vsel %vm1338, %v2072, %v2189
      %v2333 = vsel %vm1338, %v2074, %v2191
      %v2334 = vsel %vm1338, %v2076, %v2193
      %v2335 = vsel %vm1338, %v2078, %v2195
      %v2336 = vsel %vm1338, %v2080, %v2197
      %v2337 = vsel %vm1338, %v2082, %v2199
      %v2338 = vsel %vm1338, %v2084, %v2201
      %v2339 = vsel %vm1338, %v2086, %v2203
      %v2340 = vsel %vm1371, %v2332, %v2213
      %v2341 = vsel %vm1371, %v2333, %v2215
      %v2342 = vsel %vm1371, %v2334, %v2217
      %v2343 = vsel %vm1371, %v2335, %v2219
      %v2344 = vsel %vm1371, %v2336, %v2221
      %v2345 = vsel %vm1371, %v2337, %v2223
      %v2346 = vsel %vm1371, %v2338, %v2225
      %v2347 = vsel %vm1371, %v2339, %v2227
      %v2348 = vsel %vm1404, %v2340, %v2237
      %v2349 = vsel %vm1404, %v2341, %v2239
      %v2350 = vsel %vm1404, %v2342, %v2241
      %v2351 = vsel %vm1404, %v2343, %v2243
      %v2352 = vsel %vm1404, %v2344, %v2245
      %v2353 = vsel %vm1404, %v2345, %v2247
      %v2354 = vsel %vm1404, %v2346, %v2249
      %v2355 = vsel %vm1404, %v2347, %v2251
      %v2356 = vsel %vm1338, %v2113, %v2261
      %v2357 = vsel %vm1338, %v2116, %v2263
      %v2358 = vsel %vm1338, %v2119, %v2265
      %v2359 = vsel %vm1338, %v2122, %v2267
      %v2360 = vsel %vm1338, %v2125, %v2269
      %v2361 = vsel %vm1338, %v2128, %v2271
      %v2362 = vsel %vm1338, %v2131, %v2273
      %v2363 = vsel %vm1338, %v2160, %v2275
      %v2364 = vsel %vm1371, %v2356, %v2285
      %v2365 = vsel %vm1371, %v2357, %v2287
      %v2366 = vsel %vm1371, %v2358, %v2289
      %v2367 = vsel %vm1371, %v2359, %v2291
      %v2368 = vsel %vm1371, %v2360, %v2293
      %v2369 = vsel %vm1371, %v2361, %v2295
      %v2370 = vsel %vm1371, %v2362, %v2297
      %v2371 = vsel %vm1371, %v2363, %v2299
      %v2372 = vsel %vm1404, %v2364, %v2309
      %v2373 = vsel %vm1404, %v2365, %v2311
      %v2374 = vsel %vm1404, %v2366, %v2313
      %v2375 = vsel %vm1404, %v2367, %v2315
      %v2376 = vsel %vm1404, %v2368, %v2317
      %v2377 = vsel %vm1404, %v2369, %v2319
      %v2378 = vsel %vm1404, %v2370, %v2321
      %v2379 = vsel %vm1404, %v2371, %v2323
      %v2380 = vpack.c.bf16 %v2349, %v2348
      %v2381 = vpack.c.bf16 %v2373, %v2372
      %v2382 = vpack.c.bf16 %v2143, %v2140
      %v2383 = vpack.c.bf16 %v2351, %v2350
      %v2384 = vpack.c.bf16 %v2375, %v2374
      %v2385 = vpack.c.bf16 %v2149, %v2146
      %v2386 = vpack.c.bf16 %v2353, %v2352
      %v2387 = vpack.c.bf16 %v2377, %v2376
      %v2388 = vpack.c.bf16 %v2155, %v2152
      %v2389 = vpack.c.bf16 %v2355, %v2354
      %v2390 = vpack.c.bf16 %v2379, %v2378
      %v2391 = vpack.c.bf16 %v2179, %v2171
      %v2392 = vld [vmem:[%s4] sm:$0xf]
      %v2393 = vld [vmem:[%s4 + $0x4] sm:$0xf]
      %v2394 = vld [vmem:[%s4 + $0x8] sm:$0xf]
      %v2395 = vld [vmem:[%s4 + $0xc] sm:$0xf]
      %v2396 = vld [vmem:[%s4 + $0x10] sm:$0xf]
      %v2397 = vld [vmem:[%s4 + $0x14] sm:$0xf]
      %v2398 = vld [vmem:[%s4 + $0x18] sm:$0xf]
      %v2399 = vld [vmem:[%s4 + $0x1c] sm:$0xf]
      %v2400 = vld [vmem:[%s4 + $0x20] sm:$0xf]
      %v2401 = vld [vmem:[%s4 + $0x24] sm:$0xf]
      %v2402 = vld [vmem:[%s4 + $0x28] sm:$0xf]
      %v2403 = vld [vmem:[%s4 + $0x2c] sm:$0xf]
      %v2404 = vld [vmem:[%s4 + $0x30] sm:$0xf]
      %v2405 = vld [vmem:[%s4 + $0x34] sm:$0xf]
      %v2406 = vld [vmem:[%s4 + $0x38] sm:$0xf]
      %v2407 = vld [vmem:[%s4 + $0x3c] sm:$0xf]
      %v2408 = vld [vmem:[%s4 + $0x40] sm:$0xf]
      %v2409 = vld [vmem:[%s4 + $0x44] sm:$0xf]
      %v2410 = vld [vmem:[%s4 + $0x48] sm:$0xf]
      %v2411 = vld [vmem:[%s4 + $0x4c] sm:$0xf]
      %v2412 = vld [vmem:[%s4 + $0x50] sm:$0xf]
      %v2413 = vld [vmem:[%s4 + $0x54] sm:$0xf]
      %v2414 = vld [vmem:[%s4 + $0x58] sm:$0xf]
      %v2415 = vld [vmem:[%s4 + $0x5c] sm:$0xf]
      %v2416 = vld [vmem:[%s4 + $0x60] sm:$0xf]
      %v2417 = vld [vmem:[%s4 + $0x64] sm:$0xf]
      %v2418 = vld [vmem:[%s4 + $0x68] sm:$0xf]
      %v2419 = vld [vmem:[%s4 + $0x6c] sm:$0xf]
      %v2420 = vld [vmem:[%s4 + $0x70] sm:$0xf]
      %v2421 = vld [vmem:[%s4 + $0x74] sm:$0xf]
      %v2422 = vld [vmem:[%s4 + $0x78] sm:$0xf]
      %v2423 = vld [vmem:[%s4 + $0x7c] sm:$0xf]
      %v2424 = vld [vmem:[%s4 + $0x80] sm:$0xf]
      %v2425 = vld [vmem:[%s4 + $0x84] sm:$0xf]
      %v2426 = vld [vmem:[%s4 + $0x88] sm:$0xf]
      %v2427 = vld [vmem:[%s4 + $0x8c] sm:$0xf]
      %v2428 = vld [vmem:[%s5] sm:$0xff]
      %v2429 = vld [vmem:[%s5 + $0x8] sm:$0xff]
      %v2430 = vld [vmem:[%s5 + $0x10] sm:$0xff]
      %v2431 = vld [vmem:[%s5 + $0x18] sm:$0xff]
      %v2432 = vld [vmem:[%s5 + $0x20] sm:$0xff]
      %v2433 = vld [vmem:[%s5 + $0x28] sm:$0xff]
      %v2434 = vld [vmem:[%s5 + $0x30] sm:$0xff]
      %v2435 = vld [vmem:[%s5 + $0x38] sm:$0xff]
      %v2472 = vunpack.c.l.b16 %v2392
      %v2473 = vunpack.c.l.b16 %v2393
      %v2474 = vunpack.c.l.b16 %v2394
      %v2475 = vunpack.c.l.b16 %v2395
      %v2476 = vunpack.c.l.b16 %v2396
      %v2477 = vunpack.c.l.b16 %v2397
      %v2478 = vunpack.c.l.b16 %v2398
      %v2479 = vunpack.c.l.b16 %v2399
      %v2480 = vunpack.c.l.b16 %v2400
      %v2481 = vunpack.c.l.b16 %v2401
      %v2482 = vunpack.c.l.b16 %v2402
      %v2483 = vunpack.c.l.b16 %v2403
      %v2484 = vunpack.c.l.b16 %v2404
      %v2485 = vunpack.c.l.b16 %v2405
      %v2486 = vunpack.c.l.b16 %v2406
      %v2487 = vunpack.c.l.b16 %v2407
      %v2488 = vunpack.c.l.b16 %v2408
      %v2489 = vunpack.c.l.b16 %v2409
      %v2490 = vunpack.c.l.b16 %v2410
      %v2491 = vunpack.c.l.b16 %v2411
      %v2492 = vunpack.c.l.b16 %v2412
      %v2493 = vunpack.c.l.b16 %v2413
      %v2494 = vunpack.c.l.b16 %v2414
      %v2495 = vunpack.c.l.b16 %v2415
      %v2496 = vunpack.c.l.b16 %v2416
      %v2497 = vunpack.c.l.b16 %v2417
      %v2498 = vunpack.c.l.b16 %v2418
      %v2499 = vunpack.c.l.b16 %v2419
      %v2500 = vunpack.c.l.b16 %v2420
      %v2501 = vunpack.c.l.b16 %v2421
      %v2502 = vunpack.c.l.b16 %v2422
      %v2503 = vunpack.c.l.b16 %v2423
      %v2504 = vunpack.c.l.b16 %v2424
      %v2505 = vunpack.c.l.b16 %v2425
      %v2506 = vunpack.c.l.b16 %v2426
      %v2507 = vunpack.c.l.b16 %v2427
      %v2508 = vpack.c.b16 %v2473, %v2472
      %v2509 = vpack.c.b16 %v2475, %v2474
      %v2510 = vpack.c.b16 %v2477, %v2476
      %v2511 = vpack.c.b16 %v2479, %v2478
      %v2512 = vpack.c.b16 %v2481, %v2480
      %v2513 = vpack.c.b16 %v2483, %v2482
      %v2514 = vpack.c.b16 %v2485, %v2484
      %v2515 = vpack.c.b16 %v2487, %v2486
      %v2516 = vpack.c.b16 %v2489, %v2488
      %v2517 = vpack.c.b16 %v2491, %v2490
      %v2518 = vpack.c.b16 %v2493, %v2492
      %v2519 = vpack.c.b16 %v2495, %v2494
      %v2520 = vpack.c.b16 %v2497, %v2496
      %v2521 = vpack.c.b16 %v2499, %v2498
      %v2522 = vpack.c.b16 %v2501, %v2500
      %v2523 = vpack.c.b16 %v2503, %v2502
      %v2524 = vpack.c.b16 %v2505, %v2504
      %v2525 = vpack.c.b16 %v2507, %v2506
      %v2545 = vsel %vm1338, %v2382, 0
      %v2548 = vsel %vm1338, %v2385, 0
      %v2551 = vsel %vm1338, %v2388, 0
      %v2554 = vsel %vm1338, %v2391, 0
      %2556 = vmatpush.bf16.msra.mxu0 %v2515
      %2557 = vmatpush.bf16.msra.mxu0 %v2514
      %2558 = vmatpush.bf16.msra.mxu0 %v2513
      %2559 = vmatpush.bf16.msra.mxu0 %v2512
      %2560 = vmatpush.bf16.msra.mxu0 %v2511
      %2561 = vmatpush.bf16.msra.mxu0 %v2510
      %2562 = vmatpush.bf16.msra.mxu0 %v2509
      %2563 = vmatpush.bf16.msra.mxu0 %v2508
      %2564 = vmatmul.bf16.gmra.mxu0 %v2380
      %v2565 = vpop.f32.mrf.mxu0
      %v2566 = vadd.f32 %v2428, %v2565
      %v2567 = vpop.f32.mrf.mxu0
      %v2568 = vadd.f32 %v2429, %v2567
      %2569 = vmatmul.bf16.gmra.mxu0 %v2383
      %v2570 = vpop.f32.mrf.mxu0
      %v2571 = vadd.f32 %v2430, %v2570
      %v2572 = vpop.f32.mrf.mxu0
      %v2573 = vadd.f32 %v2431, %v2572
      %2574 = vmatmul.bf16.gmra.mxu0 %v2386
      %v2575 = vpop.f32.mrf.mxu0
      %v2576 = vadd.f32 %v2432, %v2575
      %v2577 = vpop.f32.mrf.mxu0
      %v2578 = vadd.f32 %v2433, %v2577
      %2579 = vmatmul.bf16.gmra.mxu0 %v2389
      %v2580 = vpop.f32.mrf.mxu0
      %v2581 = vadd.f32 %v2434, %v2580
      %v2582 = vpop.f32.mrf.mxu0
      %v2583 = vadd.f32 %v2435, %v2582
      %2584 = vdwg.mxu0
      %2585 = vmatpush.bf16.msra.mxu0 %v2523
      %2586 = vmatpush.bf16.msra.mxu0 %v2522
      %2587 = vmatpush.bf16.msra.mxu0 %v2521
      %2588 = vmatpush.bf16.msra.mxu0 %v2520
      %2589 = vmatpush.bf16.msra.mxu0 %v2519
      %2590 = vmatpush.bf16.msra.mxu0 %v2518
      %2591 = vmatpush.bf16.msra.mxu0 %v2517
      %2592 = vmatpush.bf16.msra.mxu0 %v2516
      %2593 = vmatmul.bf16.gmra.mxu0 %v2381
      %v2594 = vpop.f32.mrf.mxu0
      %v2595 = vadd.f32 %v2566, %v2594
      %v2596 = vpop.f32.mrf.mxu0
      %v2597 = vadd.f32 %v2568, %v2596
      %2598 = vmatmul.bf16.gmra.mxu0 %v2384
      %v2599 = vpop.f32.mrf.mxu0
      %v2600 = vadd.f32 %v2571, %v2599
      %v2601 = vpop.f32.mrf.mxu0
      %v2602 = vadd.f32 %v2573, %v2601
      %2603 = vmatmul.bf16.gmra.mxu0 %v2387
      %v2604 = vpop.f32.mrf.mxu0
      %v2605 = vadd.f32 %v2576, %v2604
      %v2606 = vpop.f32.mrf.mxu0
      %v2607 = vadd.f32 %v2578, %v2606
      %2608 = vmatmul.bf16.gmra.mxu0 %v2390
      %v2609 = vpop.f32.mrf.mxu0
      %v2610 = vadd.f32 %v2581, %v2609
      %v2611 = vpop.f32.mrf.mxu0
      %v2612 = vadd.f32 %v2583, %v2611
      %2613 = vdwg.mxu0
      %2614 = vmatpush.bf16.msra.mxu0 0
      %2615 = vmatpush.bf16.msra.mxu0 0
      %2616 = vmatpush.bf16.msra.mxu0 0
      %2617 = vmatpush.bf16.msra.mxu0 0
      %2618 = vmatpush.bf16.msra.mxu0 0
      %2619 = vmatpush.bf16.msra.mxu0 0
      %2620 = vmatpush.bf16.msra.mxu0 %v2525
      %2621 = vmatpush.bf16.msra.mxu0 %v2524
      %2622 = vmatmul.bf16.gmra.mxu0 %v2545
      %v2623 = vpop.f32.mrf.mxu0
      %v2624 = vadd.f32 %v2595, %v2623
      %v2625 = vpop.f32.mrf.mxu0
      %v2626 = vadd.f32 %v2597, %v2625
      %2627 = vmatmul.bf16.gmra.mxu0 %v2548
      %v2628 = vpop.f32.mrf.mxu0
      %v2629 = vadd.f32 %v2600, %v2628
      %v2630 = vpop.f32.mrf.mxu0
      %v2631 = vadd.f32 %v2602, %v2630
      %2632 = vmatmul.bf16.gmra.mxu0 %v2551
      %v2633 = vpop.f32.mrf.mxu0
      %v2634 = vadd.f32 %v2605, %v2633
      %v2635 = vpop.f32.mrf.mxu0
      %v2636 = vadd.f32 %v2607, %v2635
      %2637 = vmatmul.bf16.gmra.mxu0 %v2554
      %v2638 = vpop.f32.mrf.mxu0
      %v2639 = vadd.f32 %v2610, %v2638
      %v2640 = vpop.f32.mrf.mxu0
      %v2641 = vadd.f32 %v2612, %v2640
      %2642 = vdwg.mxu0
      %v2643 = vld [vmem:[%s6] sm:$0xff]
      %v2644 = vld [vmem:[%s6 + $0x8] sm:$0xff]
      %v2645 = vld [vmem:[%s6 + $0x10] sm:$0xff]
      %v2646 = vld [vmem:[%s6 + $0x18] sm:$0xff]
      %v2647 = vld [vmem:[%s6 + $0x20] sm:$0xff]
      %v2648 = vld [vmem:[%s6 + $0x28] sm:$0xff]
      %v2649 = vld [vmem:[%s6 + $0x30] sm:$0xff]
      %v2650 = vld [vmem:[%s6 + $0x38] sm:$0xff]
      %v2651 = vpack.c.bf16 %v1995, %v1993
      %v2652 = vpack.c.bf16 %v2000, %v1998
      %v2653 = vpack.c.bf16 %v2005, %v2003
      %v2654 = vpack.c.bf16 %v2010, %v2008
      %v2655 = vpack.c.bf16 %v2015, %v2013
      %v2656 = vpack.c.bf16 %v2020, %v2018
      %v2657 = vpack.c.bf16 %v2025, %v2023
      %v2658 = vpack.c.bf16 %v2030, %v2028
      %v2659 = vpack.c.bf16 %v2035, %v2033
      %v2660 = vpack.c.bf16 %v2040, %v2038
      %v2661 = vpack.c.bf16 %v2045, %v2043
      %v2662 = vpack.c.bf16 %v2050, %v2048
      %v2663 = vpack.c.bf16 %v2055, %v2053
      %v2664 = vpack.c.bf16 %v2060, %v2058
      %v2665 = vpack.c.bf16 %v2065, %v2063
      %v2666 = vpack.c.bf16 %v2070, %v2068
      %v2675 = vunpack.c.l.b16 %v2643
      %v2676 = vunpack.c.h.b16 %v2643
      %v2677 = vunpack.c.l.b16 %v2644
      %v2678 = vunpack.c.h.b16 %v2644
      %v2679 = vunpack.c.l.b16 %v2645
      %v2680 = vunpack.c.h.b16 %v2645
      %v2681 = vunpack.c.l.b16 %v2646
      %v2682 = vunpack.c.h.b16 %v2646
      %v2683 = vunpack.c.l.b16 %v2647
      %v2684 = vunpack.c.h.b16 %v2647
      %v2685 = vunpack.c.l.b16 %v2648
      %v2686 = vunpack.c.h.b16 %v2648
      %v2687 = vunpack.c.l.b16 %v2649
      %v2688 = vunpack.c.h.b16 %v2649
      %v2689 = vunpack.c.l.b16 %v2650
      %v2690 = vunpack.c.h.b16 %v2650
      %v2691 = vpack.c.b16 %v2677, %v2675
      %v2692 = vpack.c.b16 %v2678, %v2676
      %v2693 = vpack.c.b16 %v2681, %v2679
      %v2694 = vpack.c.b16 %v2682, %v2680
      %v2695 = vpack.c.b16 %v2685, %v2683
      %v2696 = vpack.c.b16 %v2686, %v2684
      %v2697 = vpack.c.b16 %v2689, %v2687
      %v2698 = vpack.c.b16 %v2690, %v2688
      %2707 = vmatpush.bf16.msra.mxu0 %v2658
      %2708 = vmatpush.bf16.msra.mxu0 %v2657
      %2709 = vmatpush.bf16.msra.mxu0 %v2656
      %2710 = vmatpush.bf16.msra.mxu0 %v2655
      %2711 = vmatpush.bf16.msra.mxu0 %v2654
      %2712 = vmatpush.bf16.msra.mxu0 %v2653
      %2713 = vmatpush.bf16.msra.mxu0 %v2652
      %2714 = vmatpush.bf16.msra.mxu0 %v2651
      %2715 = vmatmul.bf16.gmra.mxu0 %v2691
      %v2716 = vpop.f32.mrf.mxu0
      %v2717 = vadd.f32 0.0, %v2716
      %v2718 = vpop.f32.mrf.mxu0
      %v2719 = vadd.f32 0.0, %v2718
      %2720 = vmatmul.bf16.gmra.mxu0 %v2693
      %v2721 = vpop.f32.mrf.mxu0
      %v2722 = vadd.f32 0.0, %v2721
      %v2723 = vpop.f32.mrf.mxu0
      %v2724 = vadd.f32 0.0, %v2723
      %2725 = vmatmul.bf16.gmra.mxu0 %v2695
      %v2726 = vpop.f32.mrf.mxu0
      %v2727 = vadd.f32 0.0, %v2726
      %v2728 = vpop.f32.mrf.mxu0
      %v2729 = vadd.f32 0.0, %v2728
      %2730 = vmatmul.bf16.gmra.mxu0 %v2697
      %v2731 = vpop.f32.mrf.mxu0
      %v2732 = vadd.f32 0.0, %v2731
      %v2733 = vpop.f32.mrf.mxu0
      %v2734 = vadd.f32 0.0, %v2733
      %2735 = vdwg.mxu0
      %2736 = vmatpush.bf16.msra.mxu0 %v2666
      %2737 = vmatpush.bf16.msra.mxu0 %v2665
      %2738 = vmatpush.bf16.msra.mxu0 %v2664
      %2739 = vmatpush.bf16.msra.mxu0 %v2663
      %2740 = vmatpush.bf16.msra.mxu0 %v2662
      %2741 = vmatpush.bf16.msra.mxu0 %v2661
      %2742 = vmatpush.bf16.msra.mxu0 %v2660
      %2743 = vmatpush.bf16.msra.mxu0 %v2659
      %2744 = vmatmul.bf16.gmra.mxu0 %v2692
      %v2745 = vpop.f32.mrf.mxu0
      %v2746 = vadd.f32 %v2717, %v2745
      %v2747 = vpop.f32.mrf.mxu0
      %v2748 = vadd.f32 %v2719, %v2747
      %2749 = vmatmul.bf16.gmra.mxu0 %v2694
      %v2750 = vpop.f32.mrf.mxu0
      %v2751 = vadd.f32 %v2722, %v2750
      %v2752 = vpop.f32.mrf.mxu0
      %v2753 = vadd.f32 %v2724, %v2752
      %2754 = vmatmul.bf16.gmra.mxu0 %v2696
      %v2755 = vpop.f32.mrf.mxu0
      %v2756 = vadd.f32 %v2727, %v2755
      %v2757 = vpop.f32.mrf.mxu0
      %v2758 = vadd.f32 %v2729, %v2757
      %2759 = vmatmul.bf16.gmra.mxu0 %v2698
      %v2760 = vpop.f32.mrf.mxu0
      %v2761 = vadd.f32 %v2732, %v2760
      %v2762 = vpop.f32.mrf.mxu0
      %v2763 = vadd.f32 %v2734, %v2762
      %2764 = vdwg.mxu0
      %2765 = vxpose.xlu0.b32.start [1/16] %v2624, 128
      %2766 = vxpose.xlu0.b32.cont [2/16] %v2626, 128
      %2767 = vxpose.xlu0.b32.cont [3/16] %v2629, 128
      %2768 = vxpose.xlu0.b32.cont [4/16] %v2631, 128
      %2769 = vxpose.xlu0.b32.cont [5/16] %v2634, 128
      %2770 = vxpose.xlu0.b32.cont [6/16] %v2636, 128
      %2771 = vxpose.xlu0.b32.cont [7/16] %v2639, 128
      %2772 = vxpose.xlu0.b32.cont [8/16] %v2641, 128
      %2773 = vxpose.xlu0.b32.cont [9/16] 0.0, 128
      %2774 = vxpose.xlu0.b32.cont [10/16] 0.0, 128
      %2775 = vxpose.xlu0.b32.cont [11/16] 0.0, 128
      %2776 = vxpose.xlu0.b32.cont [12/16] 0.0, 128
      %2777 = vxpose.xlu0.b32.cont [13/16] 0.0, 128
      %2778 = vxpose.xlu0.b32.cont [14/16] 0.0, 128
      %2779 = vxpose.xlu0.b32.cont [15/16] 0.0, 128
      %2780 = vxpose.xlu0.b32.end [16/16] 0.0, 128
      %v2781 = vpop.trf.xlu0
      %v2782 = vpop.trf.xlu0
      %v2783 = vpop.trf.xlu0
      %v2784 = vpop.trf.xlu0
      %v2785 = vpop.trf.xlu0
      %v2786 = vpop.trf.xlu0
      %v2787 = vpop.trf.xlu0
      %v2788 = vpop.trf.xlu0
      %v2789 = vpop.trf.xlu0
      %v2790 = vpop.trf.xlu0
      %v2791 = vpop.trf.xlu0
      %v2792 = vpop.trf.xlu0
      %v2793 = vpop.trf.xlu0
      %v2794 = vpop.trf.xlu0
      %v2795 = vpop.trf.xlu0
      %v2796 = vpop.trf.xlu0
      %v2797 = vmul.f32 %v2781, %v2781
      %v2798 = vmul.f32 %v2782, %v2782
      %v2799 = vmul.f32 %v2783, %v2783
      %v2800 = vmul.f32 %v2784, %v2784
      %v2801 = vsel %vm1371, %v2797, 0.0
      %2802 = vadd.xlane.f32.xlu0 %v2801
      %v2803 = vpop.xlane.xlu0 %2802
      %v2804 = vsel %vm1371, %v2798, 0.0
      %2805 = vadd.xlane.f32.xlu0 %v2804
      %v2806 = vpop.xlane.xlu0 %2805
      %v2807 = vsel %vm1371, %v2799, 0.0
      %2808 = vadd.xlane.f32.xlu0 %v2807
      %v2809 = vpop.xlane.xlu0 %2808
      %v2810 = vsel %vm1371, %v2800, 0.0
      %2811 = vadd.xlane.f32.xlu0 %v2810
      %v2812 = vpop.xlane.xlu0 %2811
      %v2813 = vmax.f32 %v2803, 1e-24
      %v2814 = vmax.f32 %v2806, 1e-24
      %v2815 = vmax.f32 %v2809, 1e-24
      %v2816 = vmax.f32 %v2812, 1e-24
      %v2817 = vrsqrt.pop %v2813
      %v2818 = vmul.f32 %v2817, %v2813
      %v2819 = vmul.f32 %v2818, %v2817
      %v2820 = vmul.f32 0.5, %v2819
      %v2821 = vsub.f32 1.5, %v2820
      %v2822 = vmul.f32 %v2817, %v2821
      %vm2823 = vweird.f32 %v2813
      %vm2824 = vweird.f32 %v2817
      %vm2825 = vmor %vm2823, %vm2824
      %v2826 = vsel %vm2825, %v2817, %v2822
      %v2827 = vrsqrt.pop %v2814
      %v2828 = vmul.f32 %v2827, %v2814
      %v2829 = vmul.f32 %v2828, %v2827
      %v2830 = vmul.f32 0.5, %v2829
      %v2831 = vsub.f32 1.5, %v2830
      %v2832 = vmul.f32 %v2827, %v2831
      %vm2833 = vweird.f32 %v2814
      %vm2834 = vweird.f32 %v2827
      %vm2835 = vmor %vm2833, %vm2834
      %v2836 = vsel %vm2835, %v2827, %v2832
      %v2837 = vrsqrt.pop %v2815
      %v2838 = vmul.f32 %v2837, %v2815
      %v2839 = vmul.f32 %v2838, %v2837
      %v2840 = vmul.f32 0.5, %v2839
      %v2841 = vsub.f32 1.5, %v2840
      %v2842 = vmul.f32 %v2837, %v2841
      %vm2843 = vweird.f32 %v2815
      %vm2844 = vweird.f32 %v2837
      %vm2845 = vmor %vm2843, %vm2844
      %v2846 = vsel %vm2845, %v2837, %v2842
      %v2847 = vrsqrt.pop %v2816
      %v2848 = vmul.f32 %v2847, %v2816
      %v2849 = vmul.f32 %v2848, %v2847
      %v2850 = vmul.f32 0.5, %v2849
      %v2851 = vsub.f32 1.5, %v2850
      %v2852 = vmul.f32 %v2847, %v2851
      %vm2853 = vweird.f32 %v2816
      %vm2854 = vweird.f32 %v2847
      %vm2855 = vmor %vm2853, %vm2854
      %v2856 = vsel %vm2855, %v2847, %v2852
      %v2857 = vmul.f32 %v2781, %v2826
      %v2858 = vmul.f32 %v2782, %v2836
      %v2859 = vmul.f32 %v2783, %v2846
      %v2860 = vmul.f32 %v2784, %v2856
      %v2861 = vmul.f32 %v2746, %v2746
      %v2862 = vmul.f32 %v2748, %v2748
      %v2863 = vmul.f32 %v2751, %v2751
      %v2864 = vmul.f32 %v2753, %v2753
      %v2865 = vmul.f32 %v2756, %v2756
      %v2866 = vmul.f32 %v2758, %v2758
      %v2867 = vmul.f32 %v2761, %v2761
      %v2868 = vmul.f32 %v2763, %v2763
      %v2869 = vsel %vm1338, %v2861, 0.0
      %v2870 = vsel %vm1338, %v2862, 0.0
      %v2871 = vadd.f32 %v2869, %v2870
      %v2872 = vsel %vm1338, %v2863, 0.0
      %v2873 = vadd.f32 %v2871, %v2872
      %v2874 = vsel %vm1338, %v2864, 0.0
      %v2875 = vadd.f32 %v2873, %v2874
      %v2876 = vsel %vm1338, %v2865, 0.0
      %v2877 = vadd.f32 %v2875, %v2876
      %v2878 = vsel %vm1338, %v2866, 0.0
      %v2879 = vadd.f32 %v2877, %v2878
      %v2880 = vsel %vm1338, %v2867, 0.0
      %v2881 = vadd.f32 %v2879, %v2880
      %v2882 = vsel %vm1338, %v2868, 0.0
      %v2883 = vadd.f32 %v2881, %v2882
      %v2884 = vrot.slane %v2883, 4
      %v2885 = vadd.f32 %v2883, %v2884
      %v2886 = vrot.slane %v2885, 2
      %v2887 = vadd.f32 %v2885, %v2886
      %v2888 = vrot.slane %v2887, 1
      %v2889 = vadd.f32 %v2887, %v2888
      %v2890 = vmax.f32 %v2889, 1e-24
      %v2891 = vrsqrt.pop %v2890
      %v2892 = vmul.f32 %v2891, %v2890
      %v2893 = vmul.f32 %v2892, %v2891
      %v2894 = vmul.f32 0.5, %v2893
      %v2895 = vsub.f32 1.5, %v2894
      %v2896 = vmul.f32 %v2891, %v2895
      %vm2897 = vweird.f32 %v2890
      %vm2898 = vweird.f32 %v2891
      %vm2899 = vmor %vm2897, %vm2898
      %v2900 = vsel %vm2899, %v2891, %v2896
      %v2901 = vmul.f32 %v2746, %v2900
      %v2902 = vmul.f32 %v2748, %v2900
      %v2903 = vmul.f32 %v2751, %v2900
      %v2904 = vmul.f32 %v2753, %v2900
      %v2905 = vmul.f32 %v2756, %v2900
      %v2906 = vmul.f32 %v2758, %v2900
      %v2907 = vmul.f32 %v2761, %v2900
      %v2908 = vmul.f32 %v2763, %v2900
      %v2909 = vld [vmem:[%s7] sm:$0xff]
      %v2910 = vld [vmem:[%s7 + $0x8] sm:$0xff]
      %v2911 = vld [vmem:[%s7 + $0x10] sm:$0xff]
      %v2912 = vld [vmem:[%s7 + $0x18] sm:$0xff]
      %2914 = vset.pattern.permute.xlu0 0
      %2915 = vperm.xlu0 %2914, %v2909
      %v2916 = vpop.permute.xlu0 %2915
      %2919 = vset.pattern.permute.xlu0 0
      %2920 = vperm.xlu0 %2919, %v2910
      %v2921 = vpop.permute.xlu0 %2920
      %2924 = vset.pattern.permute.xlu0 0
      %2925 = vperm.xlu0 %2924, %v2911
      %v2926 = vpop.permute.xlu0 %2925
      %2929 = vset.pattern.permute.xlu0 0
      %2930 = vperm.xlu0 %2929, %v2912
      %v2931 = vpop.permute.xlu0 %2930
      %v2933 = vmul.f32 %v2857, %v2916
      %v2934 = vmul.f32 %v2858, %v2921
      %v2935 = vmul.f32 %v2859, %v2926
      %v2936 = vmul.f32 %v2860, %v2931
      %v2937 = vpack.c.bf16 %v2934, %v2933
      %v2938 = vpack.c.bf16 %v2936, %v2935
      %v2939 = vpack.c.bf16 %v2902, %v2901
      %v2940 = vpack.c.bf16 %v2904, %v2903
      %v2941 = vpack.c.bf16 %v2906, %v2905
      %v2942 = vpack.c.bf16 %v2908, %v2907
      %v2943 = vld [vmem:[%s8] sm:$0xff]
      %v2944 = vld [vmem:[%s8 + $0x8] sm:$0xff]
      %v2945 = vld [vmem:[%s8 + $0x10] sm:$0xff]
      %v2946 = vld [vmem:[%s8 + $0x18] sm:$0xff]
      %v2948 = vsel %vm1371, %v2937, 0
      %v2951 = vsel %vm1371, %v2938, 0
      %2953 = vmatpush.bf16.msra.mxu0 0
      %2954 = vmatpush.bf16.msra.mxu0 0
      %2955 = vmatpush.bf16.msra.mxu0 0
      %2956 = vmatpush.bf16.msra.mxu0 0
      %2957 = vmatpush.bf16.msra.mxu0 %v2942
      %2958 = vmatpush.bf16.msra.mxu0 %v2941
      %2959 = vmatpush.bf16.msra.mxu0 %v2940
      %2960 = vmatpush.bf16.msra.mxu0 %v2939
      %2961 = vmatmul.bf16.gmra.mxu0 %v2948
      %v2962 = vpop.f32.mrf.mxu0
      %v2963 = vadd.f32 %v2943, %v2962
      %v2964 = vpop.f32.mrf.mxu0
      %v2965 = vadd.f32 %v2944, %v2964
      %2966 = vmatmul.bf16.gmra.mxu0 %v2951
      %v2967 = vpop.f32.mrf.mxu0
      %v2968 = vadd.f32 %v2945, %v2967
      %v2969 = vpop.f32.mrf.mxu0
      %v2970 = vadd.f32 %v2946, %v2969
      %2971 = vdwg.mxu0
      %v2972 = vsel %vm1338, %v2963, -inf
      %2973 = vmax.xlane.f32.xlu0 %v2972
      %v2974 = vpop.xlane.xlu0 %2973
      %v2975 = vsel %vm1338, %v2965, -inf
      %2976 = vmax.xlane.f32.xlu0 %v2975
      %v2977 = vpop.xlane.xlu0 %2976
      %v2978 = vsel %vm1338, %v2968, -inf
      %2979 = vmax.xlane.f32.xlu0 %v2978
      %v2980 = vpop.xlane.xlu0 %2979
      %v2981 = vsel %vm1338, %v2970, -inf
      %2982 = vmax.xlane.f32.xlu0 %v2981
      %v2983 = vpop.xlane.xlu0 %2982
      %v2984 = vsub.f32 %v2963, %v2974
      %v2985 = vsub.f32 %v2965, %v2977
      %v2986 = vsub.f32 %v2968, %v2980
      %v2987 = vsub.f32 %v2970, %v2983
      %v2988 = vmul.f32 %v2984, 1.442695
      %v2989 = vpow.pop %v2988
      %v2990 = vmul.f32 %v2985, 1.442695
      %v2991 = vpow.pop %v2990
      %v2992 = vmul.f32 %v2986, 1.442695
      %v2993 = vpow.pop %v2992
      %v2994 = vmul.f32 %v2987, 1.442695
      %v2995 = vpow.pop %v2994
      %v2996 = vsel %vm1338, %v2989, 0.0
      %2997 = vadd.xlane.f32.xlu0 %v2996
      %v2998 = vpop.xlane.xlu0 %2997
      %v2999 = vsel %vm1338, %v2991, 0.0
      %3000 = vadd.xlane.f32.xlu0 %v2999
      %v3001 = vpop.xlane.xlu0 %3000
      %v3002 = vsel %vm1338, %v2993, 0.0
      %3003 = vadd.xlane.f32.xlu0 %v3002
      %v3004 = vpop.xlane.xlu0 %3003
      %v3005 = vsel %vm1338, %v2995, 0.0
      %3006 = vadd.xlane.f32.xlu0 %v3005
      %v3007 = vpop.xlane.xlu0 %3006
      %v3008 = vrcp.pop %v2998
      %v3009 = vrcp.pop %v3001
      %v3010 = vrcp.pop %v3004
      %v3011 = vrcp.pop %v3007
      %v3012 = vmul.f32 %v2989, %v3008
      %v3013 = vmul.f32 %v2991, %v3009
      %v3014 = vmul.f32 %v2993, %v3010
      %v3015 = vmul.f32 %v2995, %v3011
      %v3016 = vpack.c.bf16 %v3013, %v3012
      %v3017 = vpack.c.bf16 %v3015, %v3014
      %3034 = vrot.lane.b32.xlu0 %v2651, 96
      %v3035 = vpop.permute.xlu0 %3034
      %3036 = vrot.lane.b32.xlu0 %v2652, 96
      %v3037 = vpop.permute.xlu0 %3036
      %3038 = vrot.lane.b32.xlu0 %v2653, 96
      %v3039 = vpop.permute.xlu0 %3038
      %3040 = vrot.lane.b32.xlu0 %v2654, 96
      %v3041 = vpop.permute.xlu0 %3040
      %3042 = vrot.lane.b32.xlu0 %v2655, 96
      %v3043 = vpop.permute.xlu0 %3042
      %3044 = vrot.lane.b32.xlu0 %v2656, 96
      %v3045 = vpop.permute.xlu0 %3044
      %3046 = vrot.lane.b32.xlu0 %v2657, 96
      %v3047 = vpop.permute.xlu0 %3046
      %3048 = vrot.lane.b32.xlu0 %v2658, 96
      %v3049 = vpop.permute.xlu0 %3048
      %3050 = vrot.lane.b32.xlu0 %v2659, 96
      %v3051 = vpop.permute.xlu0 %3050
      %3052 = vrot.lane.b32.xlu0 %v2660, 96
      %v3053 = vpop.permute.xlu0 %3052
      %3054 = vrot.lane.b32.xlu0 %v2661, 96
      %v3055 = vpop.permute.xlu0 %3054
      %3056 = vrot.lane.b32.xlu0 %v2662, 96
      %v3057 = vpop.permute.xlu0 %3056
      %3058 = vrot.lane.b32.xlu0 %v2663, 96
      %v3059 = vpop.permute.xlu0 %3058
      %3060 = vrot.lane.b32.xlu0 %v2664, 96
      %v3061 = vpop.permute.xlu0 %3060
      %3062 = vrot.lane.b32.xlu0 %v2665, 96
      %v3063 = vpop.permute.xlu0 %3062
      %3064 = vrot.lane.b32.xlu0 %v2666, 96
      %v3065 = vpop.permute.xlu0 %3064
      %v3067 = vsel %vm1338, %v3016, 0
      %v3070 = vsel %vm1338, %v3017, 0
      %v3073 = vsel %vm1338, %v3035, 0
      %v3076 = vsel %vm1338, %v3037, 0
      %v3079 = vsel %vm1338, %v3039, 0
      %v3082 = vsel %vm1338, %v3041, 0
      %v3085 = vsel %vm1338, %v3043, 0
      %v3088 = vsel %vm1338, %v3045, 0
      %v3091 = vsel %vm1338, %v3047, 0
      %v3094 = vsel %vm1338, %v3049, 0
      %v3097 = vsel %vm1338, %v3051, 0
      %v3100 = vsel %vm1338, %v3053, 0
      %v3103 = vsel %vm1338, %v3055, 0
      %v3106 = vsel %vm1338, %v3057, 0
      %v3109 = vsel %vm1338, %v3059, 0
      %v3112 = vsel %vm1338, %v3061, 0
      %v3115 = vsel %vm1338, %v3063, 0
      %v3118 = vsel %vm1338, %v3065, 0
      %3120 = vmatpush.bf16.xpose.msra.mxu0 %v3094
      %3121 = vmatpush.bf16.xpose.msra.mxu0 %v3091
      %3122 = vmatpush.bf16.xpose.msra.mxu0 %v3088
      %3123 = vmatpush.bf16.xpose.msra.mxu0 %v3085
      %3124 = vmatpush.bf16.xpose.msra.mxu0 %v3082
      %3125 = vmatpush.bf16.xpose.msra.mxu0 %v3079
      %3126 = vmatpush.bf16.xpose.msra.mxu0 %v3076
      %3127 = vmatpush.bf16.xpose.msra.mxu0 %v3073
      %3128 = vmatmul.bf16.gmra.mxu0 %v3067
      %v3129 = vpop.f32.mrf.mxu0
      %v3130 = vadd.f32 0.0, %v3129
      %v3131 = vpop.f32.mrf.mxu0
      %v3132 = vadd.f32 0.0, %v3131
      %3133 = vmatmul.bf16.gmra.mxu0 %v3070
      %v3134 = vpop.f32.mrf.mxu0
      %v3135 = vadd.f32 0.0, %v3134
      %v3136 = vpop.f32.mrf.mxu0
      %v3137 = vadd.f32 0.0, %v3136
      %3138 = vdwg.mxu0
      %3139 = vmatpush.bf16.xpose.msra.mxu0 %v3118
      %3140 = vmatpush.bf16.xpose.msra.mxu0 %v3115
      %3141 = vmatpush.bf16.xpose.msra.mxu0 %v3112
      %3142 = vmatpush.bf16.xpose.msra.mxu0 %v3109
      %3143 = vmatpush.bf16.xpose.msra.mxu0 %v3106
      %3144 = vmatpush.bf16.xpose.msra.mxu0 %v3103
      %3145 = vmatpush.bf16.xpose.msra.mxu0 %v3100
      %3146 = vmatpush.bf16.xpose.msra.mxu0 %v3097
      %3147 = vmatmul.bf16.gmra.mxu0 %v3067
      %v3148 = vpop.f32.mrf.mxu0
      %v3149 = vadd.f32 0.0, %v3148
      %v3150 = vpop.f32.mrf.mxu0
      %v3151 = vadd.f32 0.0, %v3150
      %3152 = vmatmul.bf16.gmra.mxu0 %v3070
      %v3153 = vpop.f32.mrf.mxu0
      %v3154 = vadd.f32 0.0, %v3153
      %v3155 = vpop.f32.mrf.mxu0
      %v3156 = vadd.f32 0.0, %v3155
      %3157 = vdwg.mxu0
      %v3158 = vld [vmem:[%s9] sm:$0xf]
      %v3159 = vld [vmem:[%s9 + $0x4] sm:$0xf]
      %v3160 = vld [vmem:[%s9 + $0x8] sm:$0xf]
      %v3161 = vld [vmem:[%s9 + $0xc] sm:$0xf]
      %v3162 = vpack.c.bf16 %v3132, %v3130
      %v3163 = vpack.c.bf16 %v3151, %v3149
      %v3164 = vpack.c.bf16 %v3137, %v3135
      %v3165 = vpack.c.bf16 %v3156, %v3154
      %v3166 = vld [vmem:[%s10] sm:$0xff]
      %v3167 = vld [vmem:[%s10 + $0x8] sm:$0xff]
      %v3168 = vld [vmem:[%s10 + $0x10] sm:$0xff]
      %v3169 = vld [vmem:[%s10 + $0x18] sm:$0xff]
      %3171 = vset.pattern.permute.xlu0 0
      %3172 = vperm.xlu0 %3171, %v3166
      %v3173 = vpop.permute.xlu0 %3172
      %3176 = vset.pattern.permute.xlu0 0
      %3177 = vperm.xlu0 %3176, %v3167
      %v3178 = vpop.permute.xlu0 %3177
      %3181 = vset.pattern.permute.xlu0 0
      %3182 = vperm.xlu0 %3181, %v3168
      %v3183 = vpop.permute.xlu0 %3182
      %3186 = vset.pattern.permute.xlu0 0
      %3187 = vperm.xlu0 %3186, %v3169
      %v3188 = vpop.permute.xlu0 %3187
      %v3194 = vunpack.c.l.b16 %v3158
      %v3195 = vunpack.c.l.b16 %v3159
      %v3196 = vunpack.c.l.b16 %v3160
      %v3197 = vunpack.c.l.b16 %v3161
      %v3198 = vpack.c.b16 %v3195, %v3194
      %v3199 = vpack.c.b16 %v3197, %v3196
      %v3201 = vsel %vm1338, %v3198, 0
      %v3204 = vsel %vm1338, %v3199, 0
      %3206 = vmatpush.bf16.msra.mxu0 0
      %3207 = vmatpush.bf16.msra.mxu0 0
      %3208 = vmatpush.bf16.msra.mxu0 0
      %3209 = vmatpush.bf16.msra.mxu0 0
      %3210 = vmatpush.bf16.msra.mxu0 0
      %3211 = vmatpush.bf16.msra.mxu0 0
      %3212 = vmatpush.bf16.msra.mxu0 %v3164
      %3213 = vmatpush.bf16.msra.mxu0 %v3162
      %3214 = vmatmul.bf16.gmra.mxu0 %v3201
      %v3215 = vpop.f32.mrf.mxu0
      %v3216 = vadd.f32 %v3173, %v3215
      %v3217 = vpop.f32.mrf.mxu0
      %v3218 = vadd.f32 %v3178, %v3217
      %3219 = vmatmul.bf16.gmra.mxu0 %v3204
      %v3220 = vpop.f32.mrf.mxu0
      %v3221 = vadd.f32 %v3183, %v3220
      %v3222 = vpop.f32.mrf.mxu0
      %v3223 = vadd.f32 %v3188, %v3222
      %3224 = vdwg.mxu0
      %3225 = vmatpush.bf16.msra.mxu0 0
      %3226 = vmatpush.bf16.msra.mxu0 0
      %3227 = vmatpush.bf16.msra.mxu0 0
      %3228 = vmatpush.bf16.msra.mxu0 0
      %3229 = vmatpush.bf16.msra.mxu0 0
      %3230 = vmatpush.bf16.msra.mxu0 0
      %3231 = vmatpush.bf16.msra.mxu0 %v3165
      %3232 = vmatpush.bf16.msra.mxu0 %v3163
      %3233 = vmatmul.bf16.gmra.mxu0 %v3201
      %v3234 = vpop.f32.mrf.mxu0
      %v3235 = vadd.f32 %v3173, %v3234
      %v3236 = vpop.f32.mrf.mxu0
      %v3237 = vadd.f32 %v3178, %v3236
      %3238 = vmatmul.bf16.gmra.mxu0 %v3204
      %v3239 = vpop.f32.mrf.mxu0
      %v3240 = vadd.f32 %v3183, %v3239
      %v3241 = vpop.f32.mrf.mxu0
      %v3242 = vadd.f32 %v3188, %v3241
      %3243 = vdwg.mxu0
      %3244 = vst [vmem:[%s406] sm:$0xff] %v3216
      %3245 = vst [vmem:[%s406 + $0x8] sm:$0xff] %v3235
      %3246 = vst [vmem:[%s406 + $0x10] sm:$0xff] %v3218
      %3247 = vst [vmem:[%s406 + $0x18] sm:$0xff] %v3237
      %3248 = vst [vmem:[%s406 + $0x20] sm:$0xff] %v3221
      %3249 = vst [vmem:[%s406 + $0x28] sm:$0xff] %v3240
      %3250 = vst [vmem:[%s406 + $0x30] sm:$0xff] %v3223
      %3251 = vst [vmem:[%s406 + $0x38] sm:$0xff] %v3242
      %p3252 = scmp.lt.s32.totalorder %s22, 1
      %s3253 = scalar_select %p3252, %s22, 1
      %s3254 = smul.addr %s3253, 8
      %s3255 = smul.addr %s3254, 8
      %s3256 = scalar_lea.vmem %s11, %s3255
      // Predicated region
      $region65: #{forward.1} parent=63 // pred_check
        %p3257 = pneg %p281
      $region66: #{forward.1} parent=63 // pred_check_branch
        %3259 = sbr.rel (%p3257) target = $region68
      $region67: #{forward.1} parent=63 // pred_region
        _
      $region68: #{forward.1} parent=63 // pred_fallthru
        _
    $region64: #{forward.1} parent=5 // pred_fallthru
      _
    %p3260 = scmp.le.s32.totalorder 2, %s17
    // Predicated region
    $region69: #{forward.1} parent=5 // pred_check
      %p3261 = pneg %p3260
    $region70: #{forward.1} parent=5 // pred_check_branch
      %3263 = sbr.rel (%p3261) target = $region72
    $region71: #{forward.1} parent=5 // pred_region
      %s3264 = ssub.s32 %s17, 2
      // Predicated region
      $region73: #{forward.1} parent=71 // pred_check
        %p3265 = pneg %p287
      $region74: #{forward.1} parent=71 // pred_check_branch
        %3267 = sbr.rel (%p3265) target = $region76
      $region75: #{forward.1} parent=71 // pred_region
        %p3268 = scmp.lt.s32.totalorder %s23, 1
        %s3269 = scalar_select %p3268, %s23, 1
        %s3270 = smul.addr %s3269, 8
        %s3271 = smul.addr %s3270, 8
        %s3272 = scalar_lea.vmem %s11, %s3271
      $region76: #{forward.1} parent=71 // pred_fallthru
        _
    $region72: #{forward.1} parent=5 // pred_fallthru
      _
  $region6: #{forward.1} parent=0 // loop_footer
    %s21 = sadd.s32 1, %s17
  $region7: #{forward.1} parent=0 // loop_footer_branch
    %16 = sbr.rel target = $region3
  $region8: #{forward.1} parent=0 // loop_exit
    _

</llo_original>
